<compile_context>
chip_gen: v6e
topology: v6e:2x2x1
jax: 0.10.0
libtpu: 0.0.40
codegen_flags: <defaults>
</compile_context>

<pallas_src>
import jax
import jax.numpy as jnp
import numpy as np
from jax.experimental import pallas as pl
from jax.experimental.pallas import tpu as pltpu


def afm_kernel(emb_ref, feat_ref,
               attw_ref, attb_ref, atth_ref,
               w1t_ref, b1_ref, w2_ref, wlin_ref, outb_ref,
               out_ref):
    emb = emb_ref[...].astype(jnp.float32)            # (S, E, TB), f32 math
    S, E, TB = emb.shape
    A = attw_ref.shape[0]

    # ---- pairwise interactions: vectorized outer product over features -----
    outer = emb[:, None, :, :] * emb[None, :, :, :]   # (S, S, E, TB)

    # ---- attention MLP fused with the <h, .> contraction (VPU, unrolled A) --
    attw = attw_ref[...]                              # (A, E, 1)
    attb = attb_ref[...]                              # (A, 1, 1)
    atth = atth_ref[...]                              # (A, 1, 1)
    logits = jnp.zeros((S, S, TB), dtype=jnp.float32)
    for a in range(A):
        pre = jnp.sum(outer * attw[a], axis=2) + attb[a]      # (S, S, TB)
        logits = logits + atth[a] * jnp.tanh(pre)

    # ---- softmax over pair axes, restricted to the upper triangle (i < j) ---
    row = jax.lax.broadcasted_iota(jnp.int32, (S, S, 1), 0)
    col = jax.lax.broadcasted_iota(jnp.int32, (S, S, 1), 1)
    valid = col > row                                  # (S, S, 1)
    masked = jnp.where(valid, logits, jnp.float32(-1e30))
    m = jnp.max(jnp.max(masked, axis=1, keepdims=True),
                axis=0, keepdims=True)                 # (1, 1, TB) over valid pairs
    ev = jnp.where(valid, jnp.exp(logits - m), 0.0)    # masked pairs -> exact 0
    den = jnp.sum(jnp.sum(ev, axis=1, keepdims=True),
                  axis=0, keepdims=True)               # (1, 1, TB)
    attn = ev / den                                    # (S, S, TB)

    # ---- attention-weighted pooling -----------------------------------------
    weighted = jnp.sum(jnp.sum(outer * attn[:, :, None, :], axis=1), axis=0)  # (E, TB)

    # ---- DNN head: layer 1 on MXU (lane-dense TB), layer 2 on VPU -----------
    h = jnp.dot(w1t_ref[...], weighted,
                preferred_element_type=jnp.float32) + b1_ref[...]   # (H, TB)
    h = jnp.maximum(h, 0.0)
    dnn = jnp.sum(h * w2_ref[...], axis=0, keepdims=True)           # (1, TB)

    # ---- linear head over [sparse.float(), dense] (+ folded biases) ---------
    lin = (jnp.sum(feat_ref[...] * wlin_ref[...], axis=0, keepdims=True)
           + outb_ref[...])                                          # (1, TB)

    out_ref[...] = jax.nn.sigmoid(lin + dnn)


def afm_forward(sparse_inputs, dense_inputs, params, *,
                tile_b=128, emb_dtype=jnp.bfloat16):
    """sparse_inputs: (B, S) int32; dense_inputs: (B, D) float32 -> (B, 1)."""
    B, S = sparse_inputs.shape
    D = dense_inputs.shape[1]
    E = params["emb_tables"][0].shape[1]
    A = params["att_W"].shape[1]
    H = params["dnn_W1"].shape[1]

    # glue: per-feature embedding lookup, transposed to batch-in-lanes (S,E,B).
    # TODO(synk): move the gather in-kernel (scalar-prefetch ids + manual DMA
    # from an HBM-resident table) to avoid the HBM round trip of this slab.
    emb_t = jnp.stack(
        [jnp.take(params["emb_tables"][i], sparse_inputs[:, i], axis=0).T
         for i in range(S)], axis=0).astype(emb_dtype)               # (S, E, B)
    feats_t = jnp.concatenate(
        [sparse_inputs.astype(jnp.float32), dense_inputs], axis=1).T  # (S+D, B)

    n_tiles = pl.cdiv(B, tile_b)
    b_pad = n_tiles * tile_b
    if b_pad != B:
        pad = b_pad - B
        emb_t = jnp.pad(emb_t, ((0, 0), (0, 0), (0, pad)))
        feats_t = jnp.pad(feats_t, ((0, 0), (0, pad)))

    # weights in broadcast-ready, lane-friendly layouts (done once, wrapper side)
    attw = params["att_W"].T.reshape(A, E, 1)         # row a = attention_W[:, a]
    attb = params["att_b"].reshape(A, 1, 1)
    atth = params["att_h"].reshape(A, 1, 1)
    w1t = params["dnn_W1"].T                          # (H, E)
    b1 = params["dnn_b1"].reshape(H, 1)
    w2 = params["dnn_W2"].reshape(H, 1)
    wlin = params["lin_W"].reshape(S + D, 1)
    outb = (params["lin_b"] + params["dnn_b2"]).reshape(1, 1)

    def const_spec(shape):
        return pl.BlockSpec(shape, lambda b: (0,) * len(shape))

    out = pl.pallas_call(
        afm_kernel,
        out_shape=jax.ShapeDtypeStruct((1, b_pad), jnp.float32),
        grid=(n_tiles,),
        in_specs=[
            pl.BlockSpec((S, E, tile_b), lambda b: (0, 0, b)),
            pl.BlockSpec((S + D, tile_b), lambda b: (0, b)),
            const_spec((A, E, 1)), const_spec((A, 1, 1)), const_spec((A, 1, 1)),
            const_spec((H, E)), const_spec((H, 1)), const_spec((H, 1)),
            const_spec((S + D, 1)), const_spec((1, 1)),
        ],
        out_specs=pl.BlockSpec((1, tile_b), lambda b: (0, b)),
        compiler_params=pltpu.CompilerParams(
            dimension_semantics=("parallel",)),
    )(emb_t, feats_t, attw, attb, atth, w1t, b1, w2, wlin, outb)

    return out[0, :B].reshape(B, 1)


def afm_reference(sparse_inputs, dense_inputs, params, *, emb_dtype=jnp.bfloat16):
    """Pure-JAX reference matching the PyTorch forward (same emb storage dtype)."""
    B, S = sparse_inputs.shape
    embeds = jnp.stack(
        [jnp.take(params["emb_tables"][i], sparse_inputs[:, i], axis=0)
         for i in range(S)], axis=1)
    embeds = embeds.astype(emb_dtype).astype(jnp.float32)   # same rounding as kernel
    pairs = []
    for i in range(S):
        for j in range(i + 1, S):
            pairs.append(embeds[:, i] * embeds[:, j])
    pi = jnp.stack(pairs, axis=1)                                  # (B, P, E)
    att = jnp.tanh(jnp.einsum("bpe,ea->bpa", pi, params["att_W"])
                   + params["att_b"].reshape(-1))
    logits = jnp.einsum("bpa,a->bp", att, params["att_h"].reshape(-1))
    w = jax.nn.softmax(logits, axis=1)
    weighted = jnp.sum(pi * w[:, :, None], axis=1)
    h = jnp.maximum(weighted @ params["dnn_W1"] + params["dnn_b1"], 0.0)
    dnn_out = h @ params["dnn_W2"] + params["dnn_b2"]
    lin_in = jnp.concatenate(
        [sparse_inputs.astype(jnp.float32), dense_inputs], axis=1)
    lin_out = lin_in @ params["lin_W"] + params["lin_b"]
    return jax.nn.sigmoid(lin_out + dnn_out)


def make_params(key, num_sparse, num_dense, num_categories_list,
                embedding_dim, att_embedding_dim, hidden_units):
    keys = jax.random.split(key, 8 + num_sparse)
    emb_tables = [
        jax.random.normal(keys[i], (num_categories_list[i], embedding_dim),
                          dtype=jnp.float32)
        for i in range(num_sparse)
    ]
    k = num_sparse
    return {
        "emb_tables": emb_tables,
        "att_W": jax.random.normal(keys[k + 0], (embedding_dim, att_embedding_dim),
                                   dtype=jnp.float32),
        "att_b": jax.random.normal(keys[k + 1], (1, att_embedding_dim),
                                   dtype=jnp.float32),
        "att_h": jax.random.normal(keys[k + 2], (att_embedding_dim, 1),
                                   dtype=jnp.float32),
        "lin_W": jax.random.normal(keys[k + 3], (num_sparse + num_dense, 1),
                                   dtype=jnp.float32) * 0.1,
        "lin_b": jax.random.normal(keys[k + 4], (1, 1), dtype=jnp.float32) * 0.1,
        "dnn_W1": jax.random.normal(keys[k + 5], (embedding_dim, hidden_units),
                                    dtype=jnp.float32) * 0.1,
        "dnn_b1": jnp.zeros((1, hidden_units), dtype=jnp.float32),
        "dnn_W2": jax.random.normal(keys[k + 6], (hidden_units, 1),
                                    dtype=jnp.float32) * 0.1,
        "dnn_b2": jnp.zeros((1, 1), dtype=jnp.float32),
    }


if __name__ == "__main__":
    # small, AFM-consistent shapes
    B = 8
    num_sparse = 4
    num_dense = 3
    num_categories_list = [10, 20, 30, 40]
    embedding_dim = 8
    att_embedding_dim = 8
    hidden_units = 16

    key = jax.random.PRNGKey(0)
    kp, ks, kd = jax.random.split(key, 3)

    params = make_params(kp, num_sparse, num_dense, num_categories_list,
                         embedding_dim, att_embedding_dim, hidden_units)

    sparse_inputs = jnp.stack(
        [jax.random.randint(jax.random.fold_in(ks, i), (B,), 0,
                            num_categories_list[i], dtype=jnp.int32)
         for i in range(num_sparse)],
        axis=1,
    )                                                        # (B, S) int32
    dense_inputs = jax.random.normal(kd, (B, num_dense), dtype=jnp.float32)

    out = afm_forward(sparse_inputs, dense_inputs, params)
    out = jax.block_until_ready(out)

    ref = afm_reference(sparse_inputs, dense_inputs, params)
    np.testing.assert_allclose(np.asarray(out), np.asarray(ref),
                               rtol=2e-4, atol=2e-5)

    print("KERNEL_OK")
</pallas_src>

<mosaic_0001>
module attributes {stable_mosaic.version = 11 : i64} {
  func.func @afm_kernel(%arg0: i32, %arg1: memref<4x8x128xbf16, #tpu.memory_space<vmem>>, %arg2: memref<7x128xf32, #tpu.memory_space<vmem>>, %arg3: memref<8x8x1xf32, #tpu.memory_space<vmem>>, %arg4: memref<8x1x1xf32, #tpu.memory_space<vmem>>, %arg5: memref<8x1x1xf32, #tpu.memory_space<vmem>>, %arg6: memref<16x8xf32, #tpu.memory_space<vmem>>, %arg7: memref<16x1xf32, #tpu.memory_space<vmem>>, %arg8: memref<16x1xf32, #tpu.memory_space<vmem>>, %arg9: memref<7x1xf32, #tpu.memory_space<vmem>>, %arg10: memref<1x1xf32, #tpu.memory_space<vmem>>, %arg11: memref<1x128xf32, #tpu.memory_space<vmem>>) attributes {dimension_semantics = [#tpu.dimension_semantics<parallel>], iteration_bounds = array<i64: 1>, scalar_prefetch = 0 : i64, scratch_operands = 0 : i64, tpu.core_type = #tpu.core_type<tc>, window_params = [{transform_indices = @transform_0, window_bounds = array<i64: 4, 8, 128>}, {transform_indices = @transform_1, window_bounds = array<i64: 7, 128>}, {pipeline_mode = #tpu.pipeline_mode<synchronous>, transform_indices = @transform_2, window_bounds = array<i64: 8, 8, 1>}, {pipeline_mode = #tpu.pipeline_mode<synchronous>, transform_indices = @transform_3, window_bounds = array<i64: 8, 1, 1>}, {pipeline_mode = #tpu.pipeline_mode<synchronous>, transform_indices = @transform_4, window_bounds = array<i64: 8, 1, 1>}, {pipeline_mode = #tpu.pipeline_mode<synchronous>, transform_indices = @transform_5, window_bounds = array<i64: 16, 8>}, {pipeline_mode = #tpu.pipeline_mode<synchronous>, transform_indices = @transform_6, window_bounds = array<i64: 16, 1>}, {pipeline_mode = #tpu.pipeline_mode<synchronous>, transform_indices = @transform_7, window_bounds = array<i64: 16, 1>}, {pipeline_mode = #tpu.pipeline_mode<synchronous>, transform_indices = @transform_8, window_bounds = array<i64: 7, 1>}, {pipeline_mode = #tpu.pipeline_mode<synchronous>, transform_indices = @transform_9, window_bounds = array<i64: 1, 1>}, {transform_indices = @transform_10, window_bounds = array<i64: 1, 128>}]} {
    %c0 = arith.constant 0 : index
    %c0_0 = arith.constant 0 : index
    %c0_1 = arith.constant 0 : index
    %0 = vector.load %arg1[%c0, %c0_0, %c0_1] : memref<4x8x128xbf16, #tpu.memory_space<vmem>>, vector<4x8x128xbf16>
    %1 = arith.extf %0 : vector<4x8x128xbf16> to vector<4x8x128xf32>
    %2 = vector.shape_cast %1 : vector<4x8x128xf32> to vector<4x1x8x128xf32>
    %3 = vector.shape_cast %1 : vector<4x8x128xf32> to vector<1x4x8x128xf32>
    %4 = vector.broadcast %2 : vector<4x1x8x128xf32> to vector<4x4x8x128xf32>
    %5 = vector.broadcast %3 : vector<1x4x8x128xf32> to vector<4x4x8x128xf32>
    %6 = arith.mulf %4, %5 : vector<4x4x8x128xf32>
    %c0_2 = arith.constant 0 : index
    %c0_3 = arith.constant 0 : index
    %c0_4 = arith.constant 0 : index
    %7 = vector.load %arg3[%c0_2, %c0_3, %c0_4] : memref<8x8x1xf32, #tpu.memory_space<vmem>>, vector<8x8x1xf32>
    %c0_5 = arith.constant 0 : index
    %c0_6 = arith.constant 0 : index
    %c0_7 = arith.constant 0 : index
    %8 = vector.load %arg4[%c0_5, %c0_6, %c0_7] : memref<8x1x1xf32, #tpu.memory_space<vmem>>, vector<8x1x1xf32>
    %c0_8 = arith.constant 0 : index
    %c0_9 = arith.constant 0 : index
    %c0_10 = arith.constant 0 : index
    %9 = vector.load %arg5[%c0_8, %c0_9, %c0_10] : memref<8x1x1xf32, #tpu.memory_space<vmem>>, vector<8x1x1xf32>
    %cst = arith.constant 0.000000e+00 : f32
    %10 = vector.broadcast %cst : f32 to vector<4x4x128xf32>
    %11 = vector.extract_strided_slice %7 {offsets = [0, 0, 0], sizes = [1, 8, 1], strides = [1, 1, 1]} : vector<8x8x1xf32> to vector<1x8x1xf32>
    %12 = vector.shape_cast %11 : vector<1x8x1xf32> to vector<8x1xf32>
    %13 = vector.shape_cast %12 : vector<8x1xf32> to vector<1x1x8x1xf32>
    %14 = vector.broadcast %13 : vector<1x1x8x1xf32> to vector<4x4x8x128xf32>
    %15 = arith.mulf %6, %14 : vector<4x4x8x128xf32>
    %cst_11 = arith.constant dense<0.000000e+00> : vector<4x4x128xf32>
    %16 = vector.multi_reduction <add>, %15, %cst_11 [2] : vector<4x4x8x128xf32> to vector<4x4x128xf32>
    %17 = vector.extract_strided_slice %8 {offsets = [0, 0, 0], sizes = [1, 1, 1], strides = [1, 1, 1]} : vector<8x1x1xf32> to vector<1x1x1xf32>
    %18 = vector.shape_cast %17 : vector<1x1x1xf32> to vector<1x1xf32>
    %19 = vector.shape_cast %18 : vector<1x1xf32> to vector<1x1x1xf32>
    %20 = vector.broadcast %19 : vector<1x1x1xf32> to vector<4x4x128xf32>
    %21 = arith.addf %16, %20 : vector<4x4x128xf32>
    %22 = vector.extract_strided_slice %9 {offsets = [0, 0, 0], sizes = [1, 1, 1], strides = [1, 1, 1]} : vector<8x1x1xf32> to vector<1x1x1xf32>
    %23 = vector.shape_cast %22 : vector<1x1x1xf32> to vector<1x1xf32>
    %24 = math.tanh %21 : vector<4x4x128xf32>
    %25 = vector.shape_cast %23 : vector<1x1xf32> to vector<1x1x1xf32>
    %26 = vector.broadcast %25 : vector<1x1x1xf32> to vector<4x4x128xf32>
    %27 = arith.mulf %26, %24 : vector<4x4x128xf32>
    %28 = arith.addf %10, %27 : vector<4x4x128xf32>
    %29 = vector.extract_strided_slice %7 {offsets = [1, 0, 0], sizes = [1, 8, 1], strides = [1, 1, 1]} : vector<8x8x1xf32> to vector<1x8x1xf32>
    %30 = vector.shape_cast %29 : vector<1x8x1xf32> to vector<8x1xf32>
    %31 = vector.shape_cast %30 : vector<8x1xf32> to vector<1x1x8x1xf32>
    %32 = vector.broadcast %31 : vector<1x1x8x1xf32> to vector<4x4x8x128xf32>
    %33 = arith.mulf %6, %32 : vector<4x4x8x128xf32>
    %cst_12 = arith.constant dense<0.000000e+00> : vector<4x4x128xf32>
    %34 = vector.multi_reduction <add>, %33, %cst_12 [2] : vector<4x4x8x128xf32> to vector<4x4x128xf32>
    %35 = vector.extract_strided_slice %8 {offsets = [1, 0, 0], sizes = [1, 1, 1], strides = [1, 1, 1]} : vector<8x1x1xf32> to vector<1x1x1xf32>
    %36 = vector.shape_cast %35 : vector<1x1x1xf32> to vector<1x1xf32>
    %37 = vector.shape_cast %36 : vector<1x1xf32> to vector<1x1x1xf32>
    %38 = vector.broadcast %37 : vector<1x1x1xf32> to vector<4x4x128xf32>
    %39 = arith.addf %34, %38 : vector<4x4x128xf32>
    %40 = vector.extract_strided_slice %9 {offsets = [1, 0, 0], sizes = [1, 1, 1], strides = [1, 1, 1]} : vector<8x1x1xf32> to vector<1x1x1xf32>
    %41 = vector.shape_cast %40 : vector<1x1x1xf32> to vector<1x1xf32>
    %42 = math.tanh %39 : vector<4x4x128xf32>
    %43 = vector.shape_cast %41 : vector<1x1xf32> to vector<1x1x1xf32>
    %44 = vector.broadcast %43 : vector<1x1x1xf32> to vector<4x4x128xf32>
    %45 = arith.mulf %44, %42 : vector<4x4x128xf32>
    %46 = arith.addf %28, %45 : vector<4x4x128xf32>
    %47 = vector.extract_strided_slice %7 {offsets = [2, 0, 0], sizes = [1, 8, 1], strides = [1, 1, 1]} : vector<8x8x1xf32> to vector<1x8x1xf32>
    %48 = vector.shape_cast %47 : vector<1x8x1xf32> to vector<8x1xf32>
    %49 = vector.shape_cast %48 : vector<8x1xf32> to vector<1x1x8x1xf32>
    %50 = vector.broadcast %49 : vector<1x1x8x1xf32> to vector<4x4x8x128xf32>
    %51 = arith.mulf %6, %50 : vector<4x4x8x128xf32>
    %cst_13 = arith.constant dense<0.000000e+00> : vector<4x4x128xf32>
    %52 = vector.multi_reduction <add>, %51, %cst_13 [2] : vector<4x4x8x128xf32> to vector<4x4x128xf32>
    %53 = vector.extract_strided_slice %8 {offsets = [2, 0, 0], sizes = [1, 1, 1], strides = [1, 1, 1]} : vector<8x1x1xf32> to vector<1x1x1xf32>
    %54 = vector.shape_cast %53 : vector<1x1x1xf32> to vector<1x1xf32>
    %55 = vector.shape_cast %54 : vector<1x1xf32> to vector<1x1x1xf32>
    %56 = vector.broadcast %55 : vector<1x1x1xf32> to vector<4x4x128xf32>
    %57 = arith.addf %52, %56 : vector<4x4x128xf32>
    %58 = vector.extract_strided_slice %9 {offsets = [2, 0, 0], sizes = [1, 1, 1], strides = [1, 1, 1]} : vector<8x1x1xf32> to vector<1x1x1xf32>
    %59 = vector.shape_cast %58 : vector<1x1x1xf32> to vector<1x1xf32>
    %60 = math.tanh %57 : vector<4x4x128xf32>
    %61 = vector.shape_cast %59 : vector<1x1xf32> to vector<1x1x1xf32>
    %62 = vector.broadcast %61 : vector<1x1x1xf32> to vector<4x4x128xf32>
    %63 = arith.mulf %62, %60 : vector<4x4x128xf32>
    %64 = arith.addf %46, %63 : vector<4x4x128xf32>
    %65 = vector.extract_strided_slice %7 {offsets = [3, 0, 0], sizes = [1, 8, 1], strides = [1, 1, 1]} : vector<8x8x1xf32> to vector<1x8x1xf32>
    %66 = vector.shape_cast %65 : vector<1x8x1xf32> to vector<8x1xf32>
    %67 = vector.shape_cast %66 : vector<8x1xf32> to vector<1x1x8x1xf32>
    %68 = vector.broadcast %67 : vector<1x1x8x1xf32> to vector<4x4x8x128xf32>
    %69 = arith.mulf %6, %68 : vector<4x4x8x128xf32>
    %cst_14 = arith.constant dense<0.000000e+00> : vector<4x4x128xf32>
    %70 = vector.multi_reduction <add>, %69, %cst_14 [2] : vector<4x4x8x128xf32> to vector<4x4x128xf32>
    %71 = vector.extract_strided_slice %8 {offsets = [3, 0, 0], sizes = [1, 1, 1], strides = [1, 1, 1]} : vector<8x1x1xf32> to vector<1x1x1xf32>
    %72 = vector.shape_cast %71 : vector<1x1x1xf32> to vector<1x1xf32>
    %73 = vector.shape_cast %72 : vector<1x1xf32> to vector<1x1x1xf32>
    %74 = vector.broadcast %73 : vector<1x1x1xf32> to vector<4x4x128xf32>
    %75 = arith.addf %70, %74 : vector<4x4x128xf32>
    %76 = vector.extract_strided_slice %9 {offsets = [3, 0, 0], sizes = [1, 1, 1], strides = [1, 1, 1]} : vector<8x1x1xf32> to vector<1x1x1xf32>
    %77 = vector.shape_cast %76 : vector<1x1x1xf32> to vector<1x1xf32>
    %78 = math.tanh %75 : vector<4x4x128xf32>
    %79 = vector.shape_cast %77 : vector<1x1xf32> to vector<1x1x1xf32>
    %80 = vector.broadcast %79 : vector<1x1x1xf32> to vector<4x4x128xf32>
    %81 = arith.mulf %80, %78 : vector<4x4x128xf32>
    %82 = arith.addf %64, %81 : vector<4x4x128xf32>
    %83 = vector.extract_strided_slice %7 {offsets = [4, 0, 0], sizes = [1, 8, 1], strides = [1, 1, 1]} : vector<8x8x1xf32> to vector<1x8x1xf32>
    %84 = vector.shape_cast %83 : vector<1x8x1xf32> to vector<8x1xf32>
    %85 = vector.shape_cast %84 : vector<8x1xf32> to vector<1x1x8x1xf32>
    %86 = vector.broadcast %85 : vector<1x1x8x1xf32> to vector<4x4x8x128xf32>
    %87 = arith.mulf %6, %86 : vector<4x4x8x128xf32>
    %cst_15 = arith.constant dense<0.000000e+00> : vector<4x4x128xf32>
    %88 = vector.multi_reduction <add>, %87, %cst_15 [2] : vector<4x4x8x128xf32> to vector<4x4x128xf32>
    %89 = vector.extract_strided_slice %8 {offsets = [4, 0, 0], sizes = [1, 1, 1], strides = [1, 1, 1]} : vector<8x1x1xf32> to vector<1x1x1xf32>
    %90 = vector.shape_cast %89 : vector<1x1x1xf32> to vector<1x1xf32>
    %91 = vector.shape_cast %90 : vector<1x1xf32> to vector<1x1x1xf32>
    %92 = vector.broadcast %91 : vector<1x1x1xf32> to vector<4x4x128xf32>
    %93 = arith.addf %88, %92 : vector<4x4x128xf32>
    %94 = vector.extract_strided_slice %9 {offsets = [4, 0, 0], sizes = [1, 1, 1], strides = [1, 1, 1]} : vector<8x1x1xf32> to vector<1x1x1xf32>
    %95 = vector.shape_cast %94 : vector<1x1x1xf32> to vector<1x1xf32>
    %96 = math.tanh %93 : vector<4x4x128xf32>
    %97 = vector.shape_cast %95 : vector<1x1xf32> to vector<1x1x1xf32>
    %98 = vector.broadcast %97 : vector<1x1x1xf32> to vector<4x4x128xf32>
    %99 = arith.mulf %98, %96 : vector<4x4x128xf32>
    %100 = arith.addf %82, %99 : vector<4x4x128xf32>
    %101 = vector.extract_strided_slice %7 {offsets = [5, 0, 0], sizes = [1, 8, 1], strides = [1, 1, 1]} : vector<8x8x1xf32> to vector<1x8x1xf32>
    %102 = vector.shape_cast %101 : vector<1x8x1xf32> to vector<8x1xf32>
    %103 = vector.shape_cast %102 : vector<8x1xf32> to vector<1x1x8x1xf32>
    %104 = vector.broadcast %103 : vector<1x1x8x1xf32> to vector<4x4x8x128xf32>
    %105 = arith.mulf %6, %104 : vector<4x4x8x128xf32>
    %cst_16 = arith.constant dense<0.000000e+00> : vector<4x4x128xf32>
    %106 = vector.multi_reduction <add>, %105, %cst_16 [2] : vector<4x4x8x128xf32> to vector<4x4x128xf32>
    %107 = vector.extract_strided_slice %8 {offsets = [5, 0, 0], sizes = [1, 1, 1], strides = [1, 1, 1]} : vector<8x1x1xf32> to vector<1x1x1xf32>
    %108 = vector.shape_cast %107 : vector<1x1x1xf32> to vector<1x1xf32>
    %109 = vector.shape_cast %108 : vector<1x1xf32> to vector<1x1x1xf32>
    %110 = vector.broadcast %109 : vector<1x1x1xf32> to vector<4x4x128xf32>
    %111 = arith.addf %106, %110 : vector<4x4x128xf32>
    %112 = vector.extract_strided_slice %9 {offsets = [5, 0, 0], sizes = [1, 1, 1], strides = [1, 1, 1]} : vector<8x1x1xf32> to vector<1x1x1xf32>
    %113 = vector.shape_cast %112 : vector<1x1x1xf32> to vector<1x1xf32>
    %114 = math.tanh %111 : vector<4x4x128xf32>
    %115 = vector.shape_cast %113 : vector<1x1xf32> to vector<1x1x1xf32>
    %116 = vector.broadcast %115 : vector<1x1x1xf32> to vector<4x4x128xf32>
    %117 = arith.mulf %116, %114 : vector<4x4x128xf32>
    %118 = arith.addf %100, %117 : vector<4x4x128xf32>
    %119 = vector.extract_strided_slice %7 {offsets = [6, 0, 0], sizes = [1, 8, 1], strides = [1, 1, 1]} : vector<8x8x1xf32> to vector<1x8x1xf32>
    %120 = vector.shape_cast %119 : vector<1x8x1xf32> to vector<8x1xf32>
    %121 = vector.shape_cast %120 : vector<8x1xf32> to vector<1x1x8x1xf32>
    %122 = vector.broadcast %121 : vector<1x1x8x1xf32> to vector<4x4x8x128xf32>
    %123 = arith.mulf %6, %122 : vector<4x4x8x128xf32>
    %cst_17 = arith.constant dense<0.000000e+00> : vector<4x4x128xf32>
    %124 = vector.multi_reduction <add>, %123, %cst_17 [2] : vector<4x4x8x128xf32> to vector<4x4x128xf32>
    %125 = vector.extract_strided_slice %8 {offsets = [6, 0, 0], sizes = [1, 1, 1], strides = [1, 1, 1]} : vector<8x1x1xf32> to vector<1x1x1xf32>
    %126 = vector.shape_cast %125 : vector<1x1x1xf32> to vector<1x1xf32>
    %127 = vector.shape_cast %126 : vector<1x1xf32> to vector<1x1x1xf32>
    %128 = vector.broadcast %127 : vector<1x1x1xf32> to vector<4x4x128xf32>
    %129 = arith.addf %124, %128 : vector<4x4x128xf32>
    %130 = vector.extract_strided_slice %9 {offsets = [6, 0, 0], sizes = [1, 1, 1], strides = [1, 1, 1]} : vector<8x1x1xf32> to vector<1x1x1xf32>
    %131 = vector.shape_cast %130 : vector<1x1x1xf32> to vector<1x1xf32>
    %132 = math.tanh %129 : vector<4x4x128xf32>
    %133 = vector.shape_cast %131 : vector<1x1xf32> to vector<1x1x1xf32>
    %134 = vector.broadcast %133 : vector<1x1x1xf32> to vector<4x4x128xf32>
    %135 = arith.mulf %134, %132 : vector<4x4x128xf32>
    %136 = arith.addf %118, %135 : vector<4x4x128xf32>
    %137 = vector.extract_strided_slice %7 {offsets = [7, 0, 0], sizes = [1, 8, 1], strides = [1, 1, 1]} : vector<8x8x1xf32> to vector<1x8x1xf32>
    %138 = vector.shape_cast %137 : vector<1x8x1xf32> to vector<8x1xf32>
    %139 = vector.shape_cast %138 : vector<8x1xf32> to vector<1x1x8x1xf32>
    %140 = vector.broadcast %139 : vector<1x1x8x1xf32> to vector<4x4x8x128xf32>
    %141 = arith.mulf %6, %140 : vector<4x4x8x128xf32>
    %cst_18 = arith.constant dense<0.000000e+00> : vector<4x4x128xf32>
    %142 = vector.multi_reduction <add>, %141, %cst_18 [2] : vector<4x4x8x128xf32> to vector<4x4x128xf32>
    %143 = vector.extract_strided_slice %8 {offsets = [7, 0, 0], sizes = [1, 1, 1], strides = [1, 1, 1]} : vector<8x1x1xf32> to vector<1x1x1xf32>
    %144 = vector.shape_cast %143 : vector<1x1x1xf32> to vector<1x1xf32>
    %145 = vector.shape_cast %144 : vector<1x1xf32> to vector<1x1x1xf32>
    %146 = vector.broadcast %145 : vector<1x1x1xf32> to vector<4x4x128xf32>
    %147 = arith.addf %142, %146 : vector<4x4x128xf32>
    %148 = vector.extract_strided_slice %9 {offsets = [7, 0, 0], sizes = [1, 1, 1], strides = [1, 1, 1]} : vector<8x1x1xf32> to vector<1x1x1xf32>
    %149 = vector.shape_cast %148 : vector<1x1x1xf32> to vector<1x1xf32>
    %150 = math.tanh %147 : vector<4x4x128xf32>
    %151 = vector.shape_cast %149 : vector<1x1xf32> to vector<1x1x1xf32>
    %152 = vector.broadcast %151 : vector<1x1x1xf32> to vector<4x4x128xf32>
    %153 = arith.mulf %152, %150 : vector<4x4x128xf32>
    %154 = arith.addf %136, %153 : vector<4x4x128xf32>
    %155 = tpu.iota {dimensions = array<i32: 0>} : vector<4x4x1xi32>
    %156 = tpu.iota {dimensions = array<i32: 1>} : vector<4x4x1xi32>
    %157 = arith.cmpi sgt, %156, %155 : vector<4x4x1xi32>
    %cst_19 = arith.constant -1.000000e+30 : f32
    %158 = vector.shape_cast %157 : vector<4x4x1xi1> to vector<4x4x1xi1>
    %159 = vector.broadcast %158 : vector<4x4x1xi1> to vector<4x4x128xi1>
    %160 = vector.broadcast %cst_19 : f32 to vector<4x4x128xf32>
    %161 = arith.select %159, %154, %160 : vector<4x4x128xi1>, vector<4x4x128xf32>
    %cst_20 = arith.constant dense<0xFF800000> : vector<4x128xf32>
    %162 = vector.multi_reduction <maximumf>, %161, %cst_20 [1] : vector<4x4x128xf32> to vector<4x128xf32>
    %163 = vector.shape_cast %162 : vector<4x128xf32> to vector<4x1x128xf32>
    %cst_21 = arith.constant dense<0xFF800000> : vector<1x128xf32>
    %164 = vector.multi_reduction <maximumf>, %163, %cst_21 [0] : vector<4x1x128xf32> to vector<1x128xf32>
    %165 = vector.shape_cast %164 : vector<1x128xf32> to vector<1x1x128xf32>
    %166 = vector.broadcast %165 : vector<1x1x128xf32> to vector<4x4x128xf32>
    %167 = arith.subf %154, %166 : vector<4x4x128xf32>
    %168 = math.exp %167 : vector<4x4x128xf32>
    %cst_22 = arith.constant 0.000000e+00 : f32
    %169 = vector.shape_cast %157 : vector<4x4x1xi1> to vector<4x4x1xi1>
    %170 = vector.broadcast %169 : vector<4x4x1xi1> to vector<4x4x128xi1>
    %171 = vector.broadcast %cst_22 : f32 to vector<4x4x128xf32>
    %172 = arith.select %170, %168, %171 : vector<4x4x128xi1>, vector<4x4x128xf32>
    %cst_23 = arith.constant dense<0.000000e+00> : vector<4x128xf32>
    %173 = vector.multi_reduction <add>, %172, %cst_23 [1] : vector<4x4x128xf32> to vector<4x128xf32>
    %174 = vector.shape_cast %173 : vector<4x128xf32> to vector<4x1x128xf32>
    %cst_24 = arith.constant dense<0.000000e+00> : vector<1x128xf32>
    %175 = vector.multi_reduction <add>, %174, %cst_24 [0] : vector<4x1x128xf32> to vector<1x128xf32>
    %176 = vector.shape_cast %175 : vector<1x128xf32> to vector<1x1x128xf32>
    %177 = vector.broadcast %176 : vector<1x1x128xf32> to vector<4x4x128xf32>
    %178 = arith.divf %172, %177 : vector<4x4x128xf32>
    %179 = vector.shape_cast %178 : vector<4x4x128xf32> to vector<4x4x1x128xf32>
    %180 = vector.broadcast %179 : vector<4x4x1x128xf32> to vector<4x4x8x128xf32>
    %181 = arith.mulf %6, %180 : vector<4x4x8x128xf32>
    %cst_25 = arith.constant dense<0.000000e+00> : vector<4x8x128xf32>
    %182 = vector.multi_reduction <add>, %181, %cst_25 [1] : vector<4x4x8x128xf32> to vector<4x8x128xf32>
    %cst_26 = arith.constant dense<0.000000e+00> : vector<8x128xf32>
    %183 = vector.multi_reduction <add>, %182, %cst_26 [0] : vector<4x8x128xf32> to vector<8x128xf32>
    %c0_27 = arith.constant 0 : index
    %c0_28 = arith.constant 0 : index
    %184 = vector.load %arg6[%c0_27, %c0_28] : memref<16x8xf32, #tpu.memory_space<vmem>>, vector<16x8xf32>
    %cst_29 = arith.constant dense<0.000000e+00> : vector<16x128xf32>
    %185 = tpu.matmul %184, %183, %cst_29 {dimension_numbers = #tpu.dot_dimension_numbers<[1], [0], [0], [1], [0, 0, 1, 1], [], []>} : vector<16x8xf32>, vector<8x128xf32>, vector<16x128xf32> -> vector<16x128xf32>
    %c0_30 = arith.constant 0 : index
    %c0_31 = arith.constant 0 : index
    %186 = vector.load %arg7[%c0_30, %c0_31] : memref<16x1xf32, #tpu.memory_space<vmem>>, vector<16x1xf32>
    %187 = vector.broadcast %186 : vector<16x1xf32> to vector<16x128xf32>
    %188 = arith.addf %185, %187 : vector<16x128xf32>
    %cst_32 = arith.constant 0.000000e+00 : f32
    %189 = vector.broadcast %cst_32 : f32 to vector<16x128xf32>
    %190 = arith.maximumf %188, %189 : vector<16x128xf32>
    %c0_33 = arith.constant 0 : index
    %c0_34 = arith.constant 0 : index
    %191 = vector.load %arg8[%c0_33, %c0_34] : memref<16x1xf32, #tpu.memory_space<vmem>>, vector<16x1xf32>
    %192 = vector.broadcast %191 : vector<16x1xf32> to vector<16x128xf32>
    %193 = arith.mulf %190, %192 : vector<16x128xf32>
    %cst_35 = arith.constant dense<0.000000e+00> : vector<128xf32>
    %194 = vector.multi_reduction <add>, %193, %cst_35 [0] : vector<16x128xf32> to vector<128xf32>
    %195 = vector.shape_cast %194 : vector<128xf32> to vector<1x128xf32>
    %c0_36 = arith.constant 0 : index
    %c0_37 = arith.constant 0 : index
    %196 = vector.load %arg2[%c0_36, %c0_37] : memref<7x128xf32, #tpu.memory_space<vmem>>, vector<7x128xf32>
    %c0_38 = arith.constant 0 : index
    %c0_39 = arith.constant 0 : index
    %197 = vector.load %arg9[%c0_38, %c0_39] : memref<7x1xf32, #tpu.memory_space<vmem>>, vector<7x1xf32>
    %198 = vector.broadcast %197 : vector<7x1xf32> to vector<7x128xf32>
    %199 = arith.mulf %196, %198 : vector<7x128xf32>
    %cst_40 = arith.constant dense<0.000000e+00> : vector<128xf32>
    %200 = vector.multi_reduction <add>, %199, %cst_40 [0] : vector<7x128xf32> to vector<128xf32>
    %201 = vector.shape_cast %200 : vector<128xf32> to vector<1x128xf32>
    %c0_41 = arith.constant 0 : index
    %c0_42 = arith.constant 0 : index
    %202 = vector.load %arg10[%c0_41, %c0_42] : memref<1x1xf32, #tpu.memory_space<vmem>>, vector<1x1xf32>
    %203 = vector.broadcast %202 : vector<1x1xf32> to vector<1x128xf32>
    %204 = arith.addf %201, %203 : vector<1x128xf32>
    %205 = arith.addf %204, %195 : vector<1x128xf32>
    %206 = arith.negf %205 : vector<1x128xf32>
    %207 = math.exp %206 : vector<1x128xf32>
    %cst_43 = arith.constant 1.000000e+00 : f32
    %208 = vector.broadcast %cst_43 : f32 to vector<1x128xf32>
    %209 = arith.addf %208, %207 : vector<1x128xf32>
    %210 = arith.divf %208, %209 : vector<1x128xf32>
    %c0_44 = arith.constant 0 : index
    %c0_45 = arith.constant 0 : index
    %211 = vector.load %arg11[%c0_44, %c0_45] : memref<1x128xf32, #tpu.memory_space<vmem>>, vector<1x128xf32>
    tpu.vector_store %arg11[%c0_44, %c0_45], %210 {strides = array<i32>} : memref<1x128xf32, #tpu.memory_space<vmem>>, vector<1x128xf32>,
    return
  }
  func.func @transform_0(%arg0: i32) -> (i32, i32, i32) {
    %c0_i32 = arith.constant 0 : i32
    %c0_i32_0 = arith.constant 0 : i32
    %c0_i32_1 = arith.constant 0 : i32
    return %c0_i32, %c0_i32_0, %arg0 : i32, i32, i32
  }
  func.func @transform_1(%arg0: i32) -> (i32, i32) {
    %c0_i32 = arith.constant 0 : i32
    %c0_i32_0 = arith.constant 0 : i32
    return %c0_i32, %arg0 : i32, i32
  }
  func.func @transform_2(%arg0: i32) -> (i32, i32, i32) {
    %c0_i32 = arith.constant 0 : i32
    %c0_i32_0 = arith.constant 0 : i32
    %c0_i32_1 = arith.constant 0 : i32
    %c0_i32_2 = arith.constant 0 : i32
    return %c0_i32, %c0_i32_0, %c0_i32_1 : i32, i32, i32
  }
  func.func @transform_3(%arg0: i32) -> (i32, i32, i32) {
    %c0_i32 = arith.constant 0 : i32
    %c0_i32_0 = arith.constant 0 : i32
    %c0_i32_1 = arith.constant 0 : i32
    %c0_i32_2 = arith.constant 0 : i32
    return %c0_i32, %c0_i32_0, %c0_i32_1 : i32, i32, i32
  }
  func.func @transform_4(%arg0: i32) -> (i32, i32, i32) {
    %c0_i32 = arith.constant 0 : i32
    %c0_i32_0 = arith.constant 0 : i32
    %c0_i32_1 = arith.constant 0 : i32
    %c0_i32_2 = arith.constant 0 : i32
    return %c0_i32, %c0_i32_0, %c0_i32_1 : i32, i32, i32
  }
  func.func @transform_5(%arg0: i32) -> (i32, i32) {
    %c0_i32 = arith.constant 0 : i32
    %c0_i32_0 = arith.constant 0 : i32
    %c0_i32_1 = arith.constant 0 : i32
    return %c0_i32, %c0_i32_0 : i32, i32
  }
  func.func @transform_6(%arg0: i32) -> (i32, i32) {
    %c0_i32 = arith.constant 0 : i32
    %c0_i32_0 = arith.constant 0 : i32
    %c0_i32_1 = arith.constant 0 : i32
    return %c0_i32, %c0_i32_0 : i32, i32
  }
  func.func @transform_7(%arg0: i32) -> (i32, i32) {
    %c0_i32 = arith.constant 0 : i32
    %c0_i32_0 = arith.constant 0 : i32
    %c0_i32_1 = arith.constant 0 : i32
    return %c0_i32, %c0_i32_0 : i32, i32
  }
  func.func @transform_8(%arg0: i32) -> (i32, i32) {
    %c0_i32 = arith.constant 0 : i32
    %c0_i32_0 = arith.constant 0 : i32
    %c0_i32_1 = arith.constant 0 : i32
    return %c0_i32, %c0_i32_0 : i32, i32
  }
  func.func @transform_9(%arg0: i32) -> (i32, i32) {
    %c0_i32 = arith.constant 0 : i32
    %c0_i32_0 = arith.constant 0 : i32
    %c0_i32_1 = arith.constant 0 : i32
    return %c0_i32, %c0_i32_0 : i32, i32
  }
  func.func @transform_10(%arg0: i32) -> (i32, i32) {
    %c0_i32 = arith.constant 0 : i32
    %c0_i32_0 = arith.constant 0 : i32
    return %c0_i32, %arg0 : i32, i32
  }
}

</mosaic_0001>

<llo_original>
// kernel: tpu_custom_call.1
$region0: #{tpu_custom_call.1}
  #allocation0 [shape = 'u32[]', space=smem, size = 0x4, offset = 0x4, fixed_abs, tag = 'smem constant byte address 0x4 - core index']
  #allocation1 [shape = 'u32[144,128]{1,0:T(1,128)}', space=vmem, size = 0x12000, scoped, tag = 'internal scratch']
  #allocation2 [shape = 'f32[1,1]{1,0:T(1,128)S(1)}', space=vmem, size = 0x200, scoped, tag = 'scoped memory for tpu_custom_call.1']
  %s0 = inlined_call_operand.vmem [shape: bf16[4,8,128], index: 0, kind: input, shape index: {}]
  %s1 = inlined_call_operand.vmem [shape: f32[7,128], index: 1, kind: input, shape index: {}]
  %s2 = inlined_call_operand.vmem [shape: f32[8,8,1], index: 2, kind: input, shape index: {}]
  %s3 = inlined_call_operand.vmem [shape: f32[8,1,1], index: 3, kind: input, shape index: {}]
  %s4 = inlined_call_operand.vmem [shape: f32[8,1,1], index: 4, kind: input, shape index: {}]
  %s5 = inlined_call_operand.vmem [shape: f32[16,8], index: 5, kind: input, shape index: {}]
  %s6 = inlined_call_operand.vmem [shape: f32[16,1], index: 6, kind: input, shape index: {}]
  %s7 = inlined_call_operand.vmem [shape: f32[16,1], index: 7, kind: input, shape index: {}]
  %s8 = inlined_call_operand.vmem [shape: f32[7,1], index: 8, kind: input, shape index: {}]
  %s9 = inlined_call_operand.<no memory space> [shape: f32[1,1], index: 9, kind: input, shape index: {}]
  %s10 = inlined_call_operand.hbm [shape: f32[1,128], index: 10, kind: output, shape index: {}]
  %s11 = sld [smem:[#allocation0]]
  $region50: #{tpu_custom_call.1} parent=0
    _
  %s13 = ssub.s32 1, %s11
  %s14 = scalar_select 0, %s13, %s11
  %v15 = vstv %s9
  %16 = vst [vmem:[#allocation2] sm:$0x1] %v15
  $region1: #{tpu_custom_call.1} parent=0
    #allocation3 [shape = 'u8[512]{0}', space=vmem, size = 0x400, scoped, tag = 'output window, operand 0, single buffered']
    #allocation4 [shape = 's32[1]{0}', space=sflag, size = 0x4, scoped, tag = 'scoped memory for tpu_custom_call.1']
    %17 = vsyncpa [#allocation4], 0
    // Predicated region
    $region2: #{tpu_custom_call.1} parent=1 // pred_check
      _
    $region3: #{tpu_custom_call.1} parent=1 // pred_check_branch
      %19 = sbr.rel (0) target = $region5
    $region4: #{tpu_custom_call.1} parent=1 // pred_region
      _
    $region5: #{tpu_custom_call.1} parent=1 // pred_fallthru
      _
    // Predicated region
    $region6: #{tpu_custom_call.1} parent=1 // pred_check
      _
    $region7: #{tpu_custom_call.1} parent=1 // pred_check_branch
      %21 = sbr.rel (0) target = $region9
    $region8: #{tpu_custom_call.1} parent=1 // pred_region
      _
    $region9: #{tpu_custom_call.1} parent=1 // pred_fallthru
      _
    // Predicated region
    $region10: #{tpu_custom_call.1} parent=1 // pred_check
      _
    $region11: #{tpu_custom_call.1} parent=1 // pred_check_branch
      %23 = sbr.rel (0) target = $region13
    $region12: #{tpu_custom_call.1} parent=1 // pred_region
      _
    $region13: #{tpu_custom_call.1} parent=1 // pred_fallthru
      _
    // Predicated region
    $region14: #{tpu_custom_call.1} parent=1 // pred_check
      _
    $region15: #{tpu_custom_call.1} parent=1 // pred_check_branch
      %25 = sbr.rel (0) target = $region17
    $region16: #{tpu_custom_call.1} parent=1 // pred_region
      _
    $region17: #{tpu_custom_call.1} parent=1 // pred_fallthru
      _
    // Predicated region
    $region18: #{tpu_custom_call.1} parent=1 // pred_check
      _
    $region19: #{tpu_custom_call.1} parent=1 // pred_check_branch
      %27 = sbr.rel (0) target = $region21
    $region20: #{tpu_custom_call.1} parent=1 // pred_region
      _
    $region21: #{tpu_custom_call.1} parent=1 // pred_fallthru
      _
    // Predicated region
    $region22: #{tpu_custom_call.1} parent=1 // pred_check
      _
    $region23: #{tpu_custom_call.1} parent=1 // pred_check_branch
      %29 = sbr.rel (0) target = $region25
    $region24: #{tpu_custom_call.1} parent=1 // pred_region
      _
    $region25: #{tpu_custom_call.1} parent=1 // pred_fallthru
      _
    // Predicated region
    $region26: #{tpu_custom_call.1} parent=1 // pred_check
      _
    $region27: #{tpu_custom_call.1} parent=1 // pred_check_branch
      %31 = sbr.rel (0) target = $region29
    $region28: #{tpu_custom_call.1} parent=1 // pred_region
      _
    $region29: #{tpu_custom_call.1} parent=1 // pred_fallthru
      _
    // Predicated region
    $region30: #{tpu_custom_call.1} parent=1 // pred_check
      _
    $region31: #{tpu_custom_call.1} parent=1 // pred_check_branch
      %33 = sbr.rel (0) target = $region33
    $region32: #{tpu_custom_call.1} parent=1 // pred_region
      _
    $region33: #{tpu_custom_call.1} parent=1 // pred_fallthru
      _
    // Predicated region
    $region34: #{tpu_custom_call.1} parent=1 // pred_check
      _
    $region35: #{tpu_custom_call.1} parent=1 // pred_check_branch
      %35 = sbr.rel (0) target = $region37
    $region36: #{tpu_custom_call.1} parent=1 // pred_region
      _
    $region37: #{tpu_custom_call.1} parent=1 // pred_fallthru
      _
    // Predicated region
    $region38: #{tpu_custom_call.1} parent=1 // pred_check
      _
    $region39: #{tpu_custom_call.1} parent=1 // pred_check_branch
      %37 = sbr.rel (0) target = $region41
    $region40: #{tpu_custom_call.1} parent=1 // pred_region
      _
    $region41: #{tpu_custom_call.1} parent=1 // pred_fallthru
      _
    %v38 = vld [vmem:[%s0] sm:$0xf]
    %v39 = vld [vmem:[%s0 + $0x4] sm:$0xf]
    %v40 = vld [vmem:[%s0 + $0x8] sm:$0xf]
    %v41 = vld [vmem:[%s0 + $0xc] sm:$0xf]
    %v42 = vunpack.c.l.bf16 %v38
    %v43 = vunpack.c.l.bf16 %v39
    %v44 = vunpack.c.l.bf16 %v40
    %v45 = vunpack.c.l.bf16 %v41
    %v46 = vmul.f32 %v42, %v42
    %v47 = vmul.f32 %v42, %v43
    %v48 = vmul.f32 %v42, %v44
    %v49 = vmul.f32 %v42, %v45
    %v50 = vmul.f32 %v43, %v43
    %v51 = vmul.f32 %v43, %v44
    %v52 = vmul.f32 %v43, %v45
    %v53 = vmul.f32 %v44, %v44
    %v54 = vmul.f32 %v44, %v45
    %v55 = vmul.f32 %v45, %v45
    %v56 = vld [vmem:[%s2] sm:$0xff]
    %v57 = vld [vmem:[%s2 + $0x8] sm:$0xff]
    %v58 = vld [vmem:[%s2 + $0x10] sm:$0xff]
    %v59 = vld [vmem:[%s2 + $0x18] sm:$0xff]
    %v60 = vld [vmem:[%s2 + $0x20] sm:$0xff]
    %v61 = vld [vmem:[%s2 + $0x28] sm:$0xff]
    %v62 = vld [vmem:[%s2 + $0x30] sm:$0xff]
    %v63 = vld [vmem:[%s2 + $0x38] sm:$0xff]
    %v64 = vld [vmem:[%s3] sm:$0x1]
    %v65 = vld [vmem:[%s3 + $0x1] sm:$0x1]
    %v66 = vld [vmem:[%s3 + $0x2] sm:$0x1]
    %v67 = vld [vmem:[%s3 + $0x3] sm:$0x1]
    %v68 = vld [vmem:[%s3 + $0x4] sm:$0x1]
    %v69 = vld [vmem:[%s3 + $0x5] sm:$0x1]
    %v70 = vld [vmem:[%s3 + $0x6] sm:$0x1]
    %v71 = vld [vmem:[%s3 + $0x7] sm:$0x1]
    %v72 = vld [vmem:[%s4] sm:$0x1]
    %v73 = vld [vmem:[%s4 + $0x1] sm:$0x1]
    %v74 = vld [vmem:[%s4 + $0x2] sm:$0x1]
    %v75 = vld [vmem:[%s4 + $0x3] sm:$0x1]
    %v76 = vld [vmem:[%s4 + $0x4] sm:$0x1]
    %v77 = vld [vmem:[%s4 + $0x5] sm:$0x1]
    %v78 = vld [vmem:[%s4 + $0x6] sm:$0x1]
    %v79 = vld [vmem:[%s4 + $0x7] sm:$0x1]
    %81 = vset.pattern.permute.xlu0 0
    %82 = vperm.xlu0 %81, %v56
    %v83 = vpop.permute.xlu0 %82
    %v85 = vmul.f32 %v46, %v83
    %v86 = vmul.f32 %v47, %v83
    %v87 = vmul.f32 %v48, %v83
    %v88 = vmul.f32 %v49, %v83
    %v89 = vmul.f32 %v50, %v83
    %v90 = vmul.f32 %v51, %v83
    %v91 = vmul.f32 %v52, %v83
    %v92 = vmul.f32 %v53, %v83
    %v93 = vmul.f32 %v54, %v83
    %v94 = vmul.f32 %v55, %v83
    %v95 = vrot.slane %v85, 4
    %v96 = vadd.f32 %v85, %v95
    %v97 = vrot.slane %v96, 2
    %v98 = vadd.f32 %v96, %v97
    %v99 = vrot.slane %v98, 1
    %v100 = vadd.f32 %v98, %v99
    %v101 = vrot.slane %v86, 4
    %v102 = vadd.f32 %v86, %v101
    %v103 = vrot.slane %v102, 2
    %v104 = vadd.f32 %v102, %v103
    %v105 = vrot.slane %v104, 1
    %v106 = vadd.f32 %v104, %v105
    %v107 = vrot.slane %v87, 4
    %v108 = vadd.f32 %v87, %v107
    %v109 = vrot.slane %v108, 2
    %v110 = vadd.f32 %v108, %v109
    %v111 = vrot.slane %v110, 1
    %v112 = vadd.f32 %v110, %v111
    %v113 = vrot.slane %v88, 4
    %v114 = vadd.f32 %v88, %v113
    %v115 = vrot.slane %v114, 2
    %v116 = vadd.f32 %v114, %v115
    %v117 = vrot.slane %v116, 1
    %v118 = vadd.f32 %v116, %v117
    %v119 = vrot.slane %v89, 4
    %v120 = vadd.f32 %v89, %v119
    %v121 = vrot.slane %v120, 2
    %v122 = vadd.f32 %v120, %v121
    %v123 = vrot.slane %v122, 1
    %v124 = vadd.f32 %v122, %v123
    %v125 = vrot.slane %v90, 4
    %v126 = vadd.f32 %v90, %v125
    %v127 = vrot.slane %v126, 2
    %v128 = vadd.f32 %v126, %v127
    %v129 = vrot.slane %v128, 1
    %v130 = vadd.f32 %v128, %v129
    %v131 = vrot.slane %v91, 4
    %v132 = vadd.f32 %v91, %v131
    %v133 = vrot.slane %v132, 2
    %v134 = vadd.f32 %v132, %v133
    %v135 = vrot.slane %v134, 1
    %v136 = vadd.f32 %v134, %v135
    %v137 = vrot.slane %v92, 4
    %v138 = vadd.f32 %v92, %v137
    %v139 = vrot.slane %v138, 2
    %v140 = vadd.f32 %v138, %v139
    %v141 = vrot.slane %v140, 1
    %v142 = vadd.f32 %v140, %v141
    %v143 = vrot.slane %v93, 4
    %v144 = vadd.f32 %v93, %v143
    %v145 = vrot.slane %v144, 2
    %v146 = vadd.f32 %v144, %v145
    %v147 = vrot.slane %v146, 1
    %v148 = vadd.f32 %v146, %v147
    %v149 = vrot.slane %v94, 4
    %v150 = vadd.f32 %v94, %v149
    %v151 = vrot.slane %v150, 2
    %v152 = vadd.f32 %v150, %v151
    %v153 = vrot.slane %v152, 1
    %v154 = vadd.f32 %v152, %v153
    %v156 = vlaneseq
    %v157 = vshrl.u32 %v156, 7
    %v158 = vsub.s32 0, %v157
    %v159 = vrot.slane %v64, %v158
    %160 = vset.pattern.permute.xlu0 0
    %161 = vperm.xlu0 %160, %v159
    %v162 = vpop.permute.xlu0 %161
    %v164 = vadd.f32 %v100, %v162
    %v165 = vadd.f32 %v106, %v162
    %v166 = vadd.f32 %v112, %v162
    %v167 = vadd.f32 %v118, %v162
    %v168 = vadd.f32 %v124, %v162
    %v169 = vadd.f32 %v130, %v162
    %v170 = vadd.f32 %v136, %v162
    %v171 = vadd.f32 %v142, %v162
    %v172 = vadd.f32 %v148, %v162
    %v173 = vadd.f32 %v154, %v162
    %v174 = vtanh.pop %v164
    %v175 = vtanh.pop %v165
    %v176 = vtanh.pop %v166
    %v177 = vtanh.pop %v167
    %v178 = vtanh.pop %v168
    %v179 = vtanh.pop %v169
    %v180 = vtanh.pop %v170
    %v181 = vtanh.pop %v171
    %v182 = vtanh.pop %v172
    %v183 = vtanh.pop %v173
    %v185 = vlaneseq
    %v186 = vshrl.u32 %v185, 7
    %v187 = vsub.s32 0, %v186
    %v188 = vrot.slane %v72, %v187
    %189 = vset.pattern.permute.xlu0 0
    %190 = vperm.xlu0 %189, %v188
    %v191 = vpop.permute.xlu0 %190
    %v193 = vmul.f32 %v191, %v174
    %v194 = vmul.f32 %v191, %v175
    %v195 = vmul.f32 %v191, %v176
    %v196 = vmul.f32 %v191, %v177
    %v197 = vmul.f32 %v191, %v178
    %v198 = vmul.f32 %v191, %v179
    %v199 = vmul.f32 %v191, %v180
    %v200 = vmul.f32 %v191, %v181
    %v201 = vmul.f32 %v191, %v182
    %v202 = vmul.f32 %v191, %v183
    %v203 = vadd.f32 %v193, 0.0
    %v204 = vadd.f32 %v194, 0.0
    %v205 = vadd.f32 %v195, 0.0
    %v206 = vadd.f32 %v196, 0.0
    %v207 = vadd.f32 %v197, 0.0
    %v208 = vadd.f32 %v198, 0.0
    %v209 = vadd.f32 %v199, 0.0
    %v210 = vadd.f32 %v200, 0.0
    %v211 = vadd.f32 %v201, 0.0
    %v212 = vadd.f32 %v202, 0.0
    %214 = vset.pattern.permute.xlu0 0
    %215 = vperm.xlu0 %214, %v57
    %v216 = vpop.permute.xlu0 %215
    %v218 = vmul.f32 %v46, %v216
    %v219 = vmul.f32 %v47, %v216
    %v220 = vmul.f32 %v48, %v216
    %v221 = vmul.f32 %v49, %v216
    %v222 = vmul.f32 %v50, %v216
    %v223 = vmul.f32 %v51, %v216
    %v224 = vmul.f32 %v52, %v216
    %v225 = vmul.f32 %v53, %v216
    %v226 = vmul.f32 %v54, %v216
    %v227 = vmul.f32 %v55, %v216
    %v228 = vrot.slane %v218, 4
    %v229 = vadd.f32 %v218, %v228
    %v230 = vrot.slane %v229, 2
    %v231 = vadd.f32 %v229, %v230
    %v232 = vrot.slane %v231, 1
    %v233 = vadd.f32 %v231, %v232
    %v234 = vrot.slane %v219, 4
    %v235 = vadd.f32 %v219, %v234
    %v236 = vrot.slane %v235, 2
    %v237 = vadd.f32 %v235, %v236
    %v238 = vrot.slane %v237, 1
    %v239 = vadd.f32 %v237, %v238
    %v240 = vrot.slane %v220, 4
    %v241 = vadd.f32 %v220, %v240
    %v242 = vrot.slane %v241, 2
    %v243 = vadd.f32 %v241, %v242
    %v244 = vrot.slane %v243, 1
    %v245 = vadd.f32 %v243, %v244
    %v246 = vrot.slane %v221, 4
    %v247 = vadd.f32 %v221, %v246
    %v248 = vrot.slane %v247, 2
    %v249 = vadd.f32 %v247, %v248
    %v250 = vrot.slane %v249, 1
    %v251 = vadd.f32 %v249, %v250
    %v252 = vrot.slane %v222, 4
    %v253 = vadd.f32 %v222, %v252
    %v254 = vrot.slane %v253, 2
    %v255 = vadd.f32 %v253, %v254
    %v256 = vrot.slane %v255, 1
    %v257 = vadd.f32 %v255, %v256
    %v258 = vrot.slane %v223, 4
    %v259 = vadd.f32 %v223, %v258
    %v260 = vrot.slane %v259, 2
    %v261 = vadd.f32 %v259, %v260
    %v262 = vrot.slane %v261, 1
    %v263 = vadd.f32 %v261, %v262
    %v264 = vrot.slane %v224, 4
    %v265 = vadd.f32 %v224, %v264
    %v266 = vrot.slane %v265, 2
    %v267 = vadd.f32 %v265, %v266
    %v268 = vrot.slane %v267, 1
    %v269 = vadd.f32 %v267, %v268
    %v270 = vrot.slane %v225, 4
    %v271 = vadd.f32 %v225, %v270
    %v272 = vrot.slane %v271, 2
    %v273 = vadd.f32 %v271, %v272
    %v274 = vrot.slane %v273, 1
    %v275 = vadd.f32 %v273, %v274
    %v276 = vrot.slane %v226, 4
    %v277 = vadd.f32 %v226, %v276
    %v278 = vrot.slane %v277, 2
    %v279 = vadd.f32 %v277, %v278
    %v280 = vrot.slane %v279, 1
    %v281 = vadd.f32 %v279, %v280
    %v282 = vrot.slane %v227, 4
    %v283 = vadd.f32 %v227, %v282
    %v284 = vrot.slane %v283, 2
    %v285 = vadd.f32 %v283, %v284
    %v286 = vrot.slane %v285, 1
    %v287 = vadd.f32 %v285, %v286
    %v289 = vlaneseq
    %v290 = vshrl.u32 %v289, 7
    %v291 = vsub.s32 0, %v290
    %v292 = vrot.slane %v65, %v291
    %293 = vset.pattern.permute.xlu0 0
    %294 = vperm.xlu0 %293, %v292
    %v295 = vpop.permute.xlu0 %294
    %v297 = vadd.f32 %v233, %v295
    %v298 = vadd.f32 %v239, %v295
    %v299 = vadd.f32 %v245, %v295
    %v300 = vadd.f32 %v251, %v295
    %v301 = vadd.f32 %v257, %v295
    %v302 = vadd.f32 %v263, %v295
    %v303 = vadd.f32 %v269, %v295
    %v304 = vadd.f32 %v275, %v295
    %v305 = vadd.f32 %v281, %v295
    %v306 = vadd.f32 %v287, %v295
    %v307 = vtanh.pop %v297
    %v308 = vtanh.pop %v298
    %v309 = vtanh.pop %v299
    %v310 = vtanh.pop %v300
    %v311 = vtanh.pop %v301
    %v312 = vtanh.pop %v302
    %v313 = vtanh.pop %v303
    %v314 = vtanh.pop %v304
    %v315 = vtanh.pop %v305
    %v316 = vtanh.pop %v306
    %v318 = vlaneseq
    %v319 = vshrl.u32 %v318, 7
    %v320 = vsub.s32 0, %v319
    %v321 = vrot.slane %v73, %v320
    %322 = vset.pattern.permute.xlu0 0
    %323 = vperm.xlu0 %322, %v321
    %v324 = vpop.permute.xlu0 %323
    %v326 = vmul.f32 %v324, %v307
    %v327 = vmul.f32 %v324, %v308
    %v328 = vmul.f32 %v324, %v309
    %v329 = vmul.f32 %v324, %v310
    %v330 = vmul.f32 %v324, %v311
    %v331 = vmul.f32 %v324, %v312
    %v332 = vmul.f32 %v324, %v313
    %v333 = vmul.f32 %v324, %v314
    %v334 = vmul.f32 %v324, %v315
    %v335 = vmul.f32 %v324, %v316
    %v336 = vadd.f32 %v203, %v326
    %v337 = vadd.f32 %v204, %v327
    %v338 = vadd.f32 %v205, %v328
    %v339 = vadd.f32 %v206, %v329
    %v340 = vadd.f32 %v207, %v330
    %v341 = vadd.f32 %v208, %v331
    %v342 = vadd.f32 %v209, %v332
    %v343 = vadd.f32 %v210, %v333
    %v344 = vadd.f32 %v211, %v334
    %v345 = vadd.f32 %v212, %v335
    %347 = vset.pattern.permute.xlu0 0
    %348 = vperm.xlu0 %347, %v58
    %v349 = vpop.permute.xlu0 %348
    %v351 = vmul.f32 %v46, %v349
    %v352 = vmul.f32 %v47, %v349
    %v353 = vmul.f32 %v48, %v349
    %v354 = vmul.f32 %v49, %v349
    %v355 = vmul.f32 %v50, %v349
    %v356 = vmul.f32 %v51, %v349
    %v357 = vmul.f32 %v52, %v349
    %v358 = vmul.f32 %v53, %v349
    %v359 = vmul.f32 %v54, %v349
    %v360 = vmul.f32 %v55, %v349
    %v361 = vrot.slane %v351, 4
    %v362 = vadd.f32 %v351, %v361
    %v363 = vrot.slane %v362, 2
    %v364 = vadd.f32 %v362, %v363
    %v365 = vrot.slane %v364, 1
    %v366 = vadd.f32 %v364, %v365
    %v367 = vrot.slane %v352, 4
    %v368 = vadd.f32 %v352, %v367
    %v369 = vrot.slane %v368, 2
    %v370 = vadd.f32 %v368, %v369
    %v371 = vrot.slane %v370, 1
    %v372 = vadd.f32 %v370, %v371
    %v373 = vrot.slane %v353, 4
    %v374 = vadd.f32 %v353, %v373
    %v375 = vrot.slane %v374, 2
    %v376 = vadd.f32 %v374, %v375
    %v377 = vrot.slane %v376, 1
    %v378 = vadd.f32 %v376, %v377
    %v379 = vrot.slane %v354, 4
    %v380 = vadd.f32 %v354, %v379
    %v381 = vrot.slane %v380, 2
    %v382 = vadd.f32 %v380, %v381
    %v383 = vrot.slane %v382, 1
    %v384 = vadd.f32 %v382, %v383
    %v385 = vrot.slane %v355, 4
    %v386 = vadd.f32 %v355, %v385
    %v387 = vrot.slane %v386, 2
    %v388 = vadd.f32 %v386, %v387
    %v389 = vrot.slane %v388, 1
    %v390 = vadd.f32 %v388, %v389
    %v391 = vrot.slane %v356, 4
    %v392 = vadd.f32 %v356, %v391
    %v393 = vrot.slane %v392, 2
    %v394 = vadd.f32 %v392, %v393
    %v395 = vrot.slane %v394, 1
    %v396 = vadd.f32 %v394, %v395
    %v397 = vrot.slane %v357, 4
    %v398 = vadd.f32 %v357, %v397
    %v399 = vrot.slane %v398, 2
    %v400 = vadd.f32 %v398, %v399
    %v401 = vrot.slane %v400, 1
    %v402 = vadd.f32 %v400, %v401
    %v403 = vrot.slane %v358, 4
    %v404 = vadd.f32 %v358, %v403
    %v405 = vrot.slane %v404, 2
    %v406 = vadd.f32 %v404, %v405
    %v407 = vrot.slane %v406, 1
    %v408 = vadd.f32 %v406, %v407
    %v409 = vrot.slane %v359, 4
    %v410 = vadd.f32 %v359, %v409
    %v411 = vrot.slane %v410, 2
    %v412 = vadd.f32 %v410, %v411
    %v413 = vrot.slane %v412, 1
    %v414 = vadd.f32 %v412, %v413
    %v415 = vrot.slane %v360, 4
    %v416 = vadd.f32 %v360, %v415
    %v417 = vrot.slane %v416, 2
    %v418 = vadd.f32 %v416, %v417
    %v419 = vrot.slane %v418, 1
    %v420 = vadd.f32 %v418, %v419
    %v422 = vlaneseq
    %v423 = vshrl.u32 %v422, 7
    %v424 = vsub.s32 0, %v423
    %v425 = vrot.slane %v66, %v424
    %426 = vset.pattern.permute.xlu0 0
    %427 = vperm.xlu0 %426, %v425
    %v428 = vpop.permute.xlu0 %427
    %v430 = vadd.f32 %v366, %v428
    %v431 = vadd.f32 %v372, %v428
    %v432 = vadd.f32 %v378, %v428
    %v433 = vadd.f32 %v384, %v428
    %v434 = vadd.f32 %v390, %v428
    %v435 = vadd.f32 %v396, %v428
    %v436 = vadd.f32 %v402, %v428
    %v437 = vadd.f32 %v408, %v428
    %v438 = vadd.f32 %v414, %v428
    %v439 = vadd.f32 %v420, %v428
    %v440 = vtanh.pop %v430
    %v441 = vtanh.pop %v431
    %v442 = vtanh.pop %v432
    %v443 = vtanh.pop %v433
    %v444 = vtanh.pop %v434
    %v445 = vtanh.pop %v435
    %v446 = vtanh.pop %v436
    %v447 = vtanh.pop %v437
    %v448 = vtanh.pop %v438
    %v449 = vtanh.pop %v439
    %v451 = vlaneseq
    %v452 = vshrl.u32 %v451, 7
    %v453 = vsub.s32 0, %v452
    %v454 = vrot.slane %v74, %v453
    %455 = vset.pattern.permute.xlu0 0
    %456 = vperm.xlu0 %455, %v454
    %v457 = vpop.permute.xlu0 %456
    %v459 = vmul.f32 %v457, %v440
    %v460 = vmul.f32 %v457, %v441
    %v461 = vmul.f32 %v457, %v442
    %v462 = vmul.f32 %v457, %v443
    %v463 = vmul.f32 %v457, %v444
    %v464 = vmul.f32 %v457, %v445
    %v465 = vmul.f32 %v457, %v446
    %v466 = vmul.f32 %v457, %v447
    %v467 = vmul.f32 %v457, %v448
    %v468 = vmul.f32 %v457, %v449
    %v469 = vadd.f32 %v336, %v459
    %v470 = vadd.f32 %v337, %v460
    %v471 = vadd.f32 %v338, %v461
    %v472 = vadd.f32 %v339, %v462
    %v473 = vadd.f32 %v340, %v463
    %v474 = vadd.f32 %v341, %v464
    %v475 = vadd.f32 %v342, %v465
    %v476 = vadd.f32 %v343, %v466
    %v477 = vadd.f32 %v344, %v467
    %v478 = vadd.f32 %v345, %v468
    %480 = vset.pattern.permute.xlu0 0
    %481 = vperm.xlu0 %480, %v59
    %v482 = vpop.permute.xlu0 %481
    %v484 = vmul.f32 %v46, %v482
    %v485 = vmul.f32 %v47, %v482
    %v486 = vmul.f32 %v48, %v482
    %v487 = vmul.f32 %v49, %v482
    %v488 = vmul.f32 %v50, %v482
    %v489 = vmul.f32 %v51, %v482
    %v490 = vmul.f32 %v52, %v482
    %v491 = vmul.f32 %v53, %v482
    %v492 = vmul.f32 %v54, %v482
    %v493 = vmul.f32 %v55, %v482
    %v494 = vrot.slane %v484, 4
    %v495 = vadd.f32 %v484, %v494
    %v496 = vrot.slane %v495, 2
    %v497 = vadd.f32 %v495, %v496
    %v498 = vrot.slane %v497, 1
    %v499 = vadd.f32 %v497, %v498
    %v500 = vrot.slane %v485, 4
    %v501 = vadd.f32 %v485, %v500
    %v502 = vrot.slane %v501, 2
    %v503 = vadd.f32 %v501, %v502
    %v504 = vrot.slane %v503, 1
    %v505 = vadd.f32 %v503, %v504
    %v506 = vrot.slane %v486, 4
    %v507 = vadd.f32 %v486, %v506
    %v508 = vrot.slane %v507, 2
    %v509 = vadd.f32 %v507, %v508
    %v510 = vrot.slane %v509, 1
    %v511 = vadd.f32 %v509, %v510
    %v512 = vrot.slane %v487, 4
    %v513 = vadd.f32 %v487, %v512
    %v514 = vrot.slane %v513, 2
    %v515 = vadd.f32 %v513, %v514
    %v516 = vrot.slane %v515, 1
    %v517 = vadd.f32 %v515, %v516
    %v518 = vrot.slane %v488, 4
    %v519 = vadd.f32 %v488, %v518
    %v520 = vrot.slane %v519, 2
    %v521 = vadd.f32 %v519, %v520
    %v522 = vrot.slane %v521, 1
    %v523 = vadd.f32 %v521, %v522
    %v524 = vrot.slane %v489, 4
    %v525 = vadd.f32 %v489, %v524
    %v526 = vrot.slane %v525, 2
    %v527 = vadd.f32 %v525, %v526
    %v528 = vrot.slane %v527, 1
    %v529 = vadd.f32 %v527, %v528
    %v530 = vrot.slane %v490, 4
    %v531 = vadd.f32 %v490, %v530
    %v532 = vrot.slane %v531, 2
    %v533 = vadd.f32 %v531, %v532
    %v534 = vrot.slane %v533, 1
    %v535 = vadd.f32 %v533, %v534
    %v536 = vrot.slane %v491, 4
    %v537 = vadd.f32 %v491, %v536
    %v538 = vrot.slane %v537, 2
    %v539 = vadd.f32 %v537, %v538
    %v540 = vrot.slane %v539, 1
    %v541 = vadd.f32 %v539, %v540
    %v542 = vrot.slane %v492, 4
    %v543 = vadd.f32 %v492, %v542
    %v544 = vrot.slane %v543, 2
    %v545 = vadd.f32 %v543, %v544
    %v546 = vrot.slane %v545, 1
    %v547 = vadd.f32 %v545, %v546
    %v548 = vrot.slane %v493, 4
    %v549 = vadd.f32 %v493, %v548
    %v550 = vrot.slane %v549, 2
    %v551 = vadd.f32 %v549, %v550
    %v552 = vrot.slane %v551, 1
    %v553 = vadd.f32 %v551, %v552
    %v555 = vlaneseq
    %v556 = vshrl.u32 %v555, 7
    %v557 = vsub.s32 0, %v556
    %v558 = vrot.slane %v67, %v557
    %559 = vset.pattern.permute.xlu0 0
    %560 = vperm.xlu0 %559, %v558
    %v561 = vpop.permute.xlu0 %560
    %v563 = vadd.f32 %v499, %v561
    %v564 = vadd.f32 %v505, %v561
    %v565 = vadd.f32 %v511, %v561
    %v566 = vadd.f32 %v517, %v561
    %v567 = vadd.f32 %v523, %v561
    %v568 = vadd.f32 %v529, %v561
    %v569 = vadd.f32 %v535, %v561
    %v570 = vadd.f32 %v541, %v561
    %v571 = vadd.f32 %v547, %v561
    %v572 = vadd.f32 %v553, %v561
    %v573 = vtanh.pop %v563
    %v574 = vtanh.pop %v564
    %v575 = vtanh.pop %v565
    %v576 = vtanh.pop %v566
    %v577 = vtanh.pop %v567
    %v578 = vtanh.pop %v568
    %v579 = vtanh.pop %v569
    %v580 = vtanh.pop %v570
    %v581 = vtanh.pop %v571
    %v582 = vtanh.pop %v572
    %v584 = vlaneseq
    %v585 = vshrl.u32 %v584, 7
    %v586 = vsub.s32 0, %v585
    %v587 = vrot.slane %v75, %v586
    %588 = vset.pattern.permute.xlu0 0
    %589 = vperm.xlu0 %588, %v587
    %v590 = vpop.permute.xlu0 %589
    %v592 = vmul.f32 %v590, %v573
    %v593 = vmul.f32 %v590, %v574
    %v594 = vmul.f32 %v590, %v575
    %v595 = vmul.f32 %v590, %v576
    %v596 = vmul.f32 %v590, %v577
    %v597 = vmul.f32 %v590, %v578
    %v598 = vmul.f32 %v590, %v579
    %v599 = vmul.f32 %v590, %v580
    %v600 = vmul.f32 %v590, %v581
    %v601 = vmul.f32 %v590, %v582
    %v602 = vadd.f32 %v469, %v592
    %v603 = vadd.f32 %v470, %v593
    %v604 = vadd.f32 %v471, %v594
    %v605 = vadd.f32 %v472, %v595
    %v606 = vadd.f32 %v473, %v596
    %v607 = vadd.f32 %v474, %v597
    %v608 = vadd.f32 %v475, %v598
    %v609 = vadd.f32 %v476, %v599
    %v610 = vadd.f32 %v477, %v600
    %v611 = vadd.f32 %v478, %v601
    %613 = vset.pattern.permute.xlu0 0
    %614 = vperm.xlu0 %613, %v60
    %v615 = vpop.permute.xlu0 %614
    %v617 = vmul.f32 %v46, %v615
    %v618 = vmul.f32 %v47, %v615
    %v619 = vmul.f32 %v48, %v615
    %v620 = vmul.f32 %v49, %v615
    %v621 = vmul.f32 %v50, %v615
    %v622 = vmul.f32 %v51, %v615
    %v623 = vmul.f32 %v52, %v615
    %v624 = vmul.f32 %v53, %v615
    %v625 = vmul.f32 %v54, %v615
    %v626 = vmul.f32 %v55, %v615
    %v627 = vrot.slane %v617, 4
    %v628 = vadd.f32 %v617, %v627
    %v629 = vrot.slane %v628, 2
    %v630 = vadd.f32 %v628, %v629
    %v631 = vrot.slane %v630, 1
    %v632 = vadd.f32 %v630, %v631
    %v633 = vrot.slane %v618, 4
    %v634 = vadd.f32 %v618, %v633
    %v635 = vrot.slane %v634, 2
    %v636 = vadd.f32 %v634, %v635
    %v637 = vrot.slane %v636, 1
    %v638 = vadd.f32 %v636, %v637
    %v639 = vrot.slane %v619, 4
    %v640 = vadd.f32 %v619, %v639
    %v641 = vrot.slane %v640, 2
    %v642 = vadd.f32 %v640, %v641
    %v643 = vrot.slane %v642, 1
    %v644 = vadd.f32 %v642, %v643
    %v645 = vrot.slane %v620, 4
    %v646 = vadd.f32 %v620, %v645
    %v647 = vrot.slane %v646, 2
    %v648 = vadd.f32 %v646, %v647
    %v649 = vrot.slane %v648, 1
    %v650 = vadd.f32 %v648, %v649
    %v651 = vrot.slane %v621, 4
    %v652 = vadd.f32 %v621, %v651
    %v653 = vrot.slane %v652, 2
    %v654 = vadd.f32 %v652, %v653
    %v655 = vrot.slane %v654, 1
    %v656 = vadd.f32 %v654, %v655
    %v657 = vrot.slane %v622, 4
    %v658 = vadd.f32 %v622, %v657
    %v659 = vrot.slane %v658, 2
    %v660 = vadd.f32 %v658, %v659
    %v661 = vrot.slane %v660, 1
    %v662 = vadd.f32 %v660, %v661
    %v663 = vrot.slane %v623, 4
    %v664 = vadd.f32 %v623, %v663
    %v665 = vrot.slane %v664, 2
    %v666 = vadd.f32 %v664, %v665
    %v667 = vrot.slane %v666, 1
    %v668 = vadd.f32 %v666, %v667
    %v669 = vrot.slane %v624, 4
    %v670 = vadd.f32 %v624, %v669
    %v671 = vrot.slane %v670, 2
    %v672 = vadd.f32 %v670, %v671
    %v673 = vrot.slane %v672, 1
    %v674 = vadd.f32 %v672, %v673
    %v675 = vrot.slane %v625, 4
    %v676 = vadd.f32 %v625, %v675
    %v677 = vrot.slane %v676, 2
    %v678 = vadd.f32 %v676, %v677
    %v679 = vrot.slane %v678, 1
    %v680 = vadd.f32 %v678, %v679
    %v681 = vrot.slane %v626, 4
    %v682 = vadd.f32 %v626, %v681
    %v683 = vrot.slane %v682, 2
    %v684 = vadd.f32 %v682, %v683
    %v685 = vrot.slane %v684, 1
    %v686 = vadd.f32 %v684, %v685
    %v688 = vlaneseq
    %v689 = vshrl.u32 %v688, 7
    %v690 = vsub.s32 0, %v689
    %v691 = vrot.slane %v68, %v690
    %692 = vset.pattern.permute.xlu0 0
    %693 = vperm.xlu0 %692, %v691
    %v694 = vpop.permute.xlu0 %693
    %v696 = vadd.f32 %v632, %v694
    %v697 = vadd.f32 %v638, %v694
    %v698 = vadd.f32 %v644, %v694
    %v699 = vadd.f32 %v650, %v694
    %v700 = vadd.f32 %v656, %v694
    %v701 = vadd.f32 %v662, %v694
    %v702 = vadd.f32 %v668, %v694
    %v703 = vadd.f32 %v674, %v694
    %v704 = vadd.f32 %v680, %v694
    %v705 = vadd.f32 %v686, %v694
    %v706 = vtanh.pop %v696
    %v707 = vtanh.pop %v697
    %v708 = vtanh.pop %v698
    %v709 = vtanh.pop %v699
    %v710 = vtanh.pop %v700
    %v711 = vtanh.pop %v701
    %v712 = vtanh.pop %v702
    %v713 = vtanh.pop %v703
    %v714 = vtanh.pop %v704
    %v715 = vtanh.pop %v705
    %v717 = vlaneseq
    %v718 = vshrl.u32 %v717, 7
    %v719 = vsub.s32 0, %v718
    %v720 = vrot.slane %v76, %v719
    %721 = vset.pattern.permute.xlu0 0
    %722 = vperm.xlu0 %721, %v720
    %v723 = vpop.permute.xlu0 %722
    %v725 = vmul.f32 %v723, %v706
    %v726 = vmul.f32 %v723, %v707
    %v727 = vmul.f32 %v723, %v708
    %v728 = vmul.f32 %v723, %v709
    %v729 = vmul.f32 %v723, %v710
    %v730 = vmul.f32 %v723, %v711
    %v731 = vmul.f32 %v723, %v712
    %v732 = vmul.f32 %v723, %v713
    %v733 = vmul.f32 %v723, %v714
    %v734 = vmul.f32 %v723, %v715
    %v735 = vadd.f32 %v602, %v725
    %v736 = vadd.f32 %v603, %v726
    %v737 = vadd.f32 %v604, %v727
    %v738 = vadd.f32 %v605, %v728
    %v739 = vadd.f32 %v606, %v729
    %v740 = vadd.f32 %v607, %v730
    %v741 = vadd.f32 %v608, %v731
    %v742 = vadd.f32 %v609, %v732
    %v743 = vadd.f32 %v610, %v733
    %v744 = vadd.f32 %v611, %v734
    %746 = vset.pattern.permute.xlu0 0
    %747 = vperm.xlu0 %746, %v61
    %v748 = vpop.permute.xlu0 %747
    %v750 = vmul.f32 %v46, %v748
    %v751 = vmul.f32 %v47, %v748
    %v752 = vmul.f32 %v48, %v748
    %v753 = vmul.f32 %v49, %v748
    %v754 = vmul.f32 %v50, %v748
    %v755 = vmul.f32 %v51, %v748
    %v756 = vmul.f32 %v52, %v748
    %v757 = vmul.f32 %v53, %v748
    %v758 = vmul.f32 %v54, %v748
    %v759 = vmul.f32 %v55, %v748
    %v760 = vrot.slane %v750, 4
    %v761 = vadd.f32 %v750, %v760
    %v762 = vrot.slane %v761, 2
    %v763 = vadd.f32 %v761, %v762
    %v764 = vrot.slane %v763, 1
    %v765 = vadd.f32 %v763, %v764
    %v766 = vrot.slane %v751, 4
    %v767 = vadd.f32 %v751, %v766
    %v768 = vrot.slane %v767, 2
    %v769 = vadd.f32 %v767, %v768
    %v770 = vrot.slane %v769, 1
    %v771 = vadd.f32 %v769, %v770
    %v772 = vrot.slane %v752, 4
    %v773 = vadd.f32 %v752, %v772
    %v774 = vrot.slane %v773, 2
    %v775 = vadd.f32 %v773, %v774
    %v776 = vrot.slane %v775, 1
    %v777 = vadd.f32 %v775, %v776
    %v778 = vrot.slane %v753, 4
    %v779 = vadd.f32 %v753, %v778
    %v780 = vrot.slane %v779, 2
    %v781 = vadd.f32 %v779, %v780
    %v782 = vrot.slane %v781, 1
    %v783 = vadd.f32 %v781, %v782
    %v784 = vrot.slane %v754, 4
    %v785 = vadd.f32 %v754, %v784
    %v786 = vrot.slane %v785, 2
    %v787 = vadd.f32 %v785, %v786
    %v788 = vrot.slane %v787, 1
    %v789 = vadd.f32 %v787, %v788
    %v790 = vrot.slane %v755, 4
    %v791 = vadd.f32 %v755, %v790
    %v792 = vrot.slane %v791, 2
    %v793 = vadd.f32 %v791, %v792
    %v794 = vrot.slane %v793, 1
    %v795 = vadd.f32 %v793, %v794
    %v796 = vrot.slane %v756, 4
    %v797 = vadd.f32 %v756, %v796
    %v798 = vrot.slane %v797, 2
    %v799 = vadd.f32 %v797, %v798
    %v800 = vrot.slane %v799, 1
    %v801 = vadd.f32 %v799, %v800
    %v802 = vrot.slane %v757, 4
    %v803 = vadd.f32 %v757, %v802
    %v804 = vrot.slane %v803, 2
    %v805 = vadd.f32 %v803, %v804
    %v806 = vrot.slane %v805, 1
    %v807 = vadd.f32 %v805, %v806
    %v808 = vrot.slane %v758, 4
    %v809 = vadd.f32 %v758, %v808
    %v810 = vrot.slane %v809, 2
    %v811 = vadd.f32 %v809, %v810
    %v812 = vrot.slane %v811, 1
    %v813 = vadd.f32 %v811, %v812
    %v814 = vrot.slane %v759, 4
    %v815 = vadd.f32 %v759, %v814
    %v816 = vrot.slane %v815, 2
    %v817 = vadd.f32 %v815, %v816
    %v818 = vrot.slane %v817, 1
    %v819 = vadd.f32 %v817, %v818
    %v821 = vlaneseq
    %v822 = vshrl.u32 %v821, 7
    %v823 = vsub.s32 0, %v822
    %v824 = vrot.slane %v69, %v823
    %825 = vset.pattern.permute.xlu0 0
    %826 = vperm.xlu0 %825, %v824
    %v827 = vpop.permute.xlu0 %826
    %v829 = vadd.f32 %v765, %v827
    %v830 = vadd.f32 %v771, %v827
    %v831 = vadd.f32 %v777, %v827
    %v832 = vadd.f32 %v783, %v827
    %v833 = vadd.f32 %v789, %v827
    %v834 = vadd.f32 %v795, %v827
    %v835 = vadd.f32 %v801, %v827
    %v836 = vadd.f32 %v807, %v827
    %v837 = vadd.f32 %v813, %v827
    %v838 = vadd.f32 %v819, %v827
    %v839 = vtanh.pop %v829
    %v840 = vtanh.pop %v830
    %v841 = vtanh.pop %v831
    %v842 = vtanh.pop %v832
    %v843 = vtanh.pop %v833
    %v844 = vtanh.pop %v834
    %v845 = vtanh.pop %v835
    %v846 = vtanh.pop %v836
    %v847 = vtanh.pop %v837
    %v848 = vtanh.pop %v838
    %v850 = vlaneseq
    %v851 = vshrl.u32 %v850, 7
    %v852 = vsub.s32 0, %v851
    %v853 = vrot.slane %v77, %v852
    %854 = vset.pattern.permute.xlu0 0
    %855 = vperm.xlu0 %854, %v853
    %v856 = vpop.permute.xlu0 %855
    %v858 = vmul.f32 %v856, %v839
    %v859 = vmul.f32 %v856, %v840
    %v860 = vmul.f32 %v856, %v841
    %v861 = vmul.f32 %v856, %v842
    %v862 = vmul.f32 %v856, %v843
    %v863 = vmul.f32 %v856, %v844
    %v864 = vmul.f32 %v856, %v845
    %v865 = vmul.f32 %v856, %v846
    %v866 = vmul.f32 %v856, %v847
    %v867 = vmul.f32 %v856, %v848
    %v868 = vadd.f32 %v735, %v858
    %v869 = vadd.f32 %v736, %v859
    %v870 = vadd.f32 %v737, %v860
    %v871 = vadd.f32 %v738, %v861
    %v872 = vadd.f32 %v739, %v862
    %v873 = vadd.f32 %v740, %v863
    %v874 = vadd.f32 %v741, %v864
    %v875 = vadd.f32 %v742, %v865
    %v876 = vadd.f32 %v743, %v866
    %v877 = vadd.f32 %v744, %v867
    %879 = vset.pattern.permute.xlu0 0
    %880 = vperm.xlu0 %879, %v62
    %v881 = vpop.permute.xlu0 %880
    %v883 = vmul.f32 %v46, %v881
    %v884 = vmul.f32 %v47, %v881
    %v885 = vmul.f32 %v48, %v881
    %v886 = vmul.f32 %v49, %v881
    %v887 = vmul.f32 %v50, %v881
    %v888 = vmul.f32 %v51, %v881
    %v889 = vmul.f32 %v52, %v881
    %v890 = vmul.f32 %v53, %v881
    %v891 = vmul.f32 %v54, %v881
    %v892 = vmul.f32 %v55, %v881
    %v893 = vrot.slane %v883, 4
    %v894 = vadd.f32 %v883, %v893
    %v895 = vrot.slane %v894, 2
    %v896 = vadd.f32 %v894, %v895
    %v897 = vrot.slane %v896, 1
    %v898 = vadd.f32 %v896, %v897
    %v899 = vrot.slane %v884, 4
    %v900 = vadd.f32 %v884, %v899
    %v901 = vrot.slane %v900, 2
    %v902 = vadd.f32 %v900, %v901
    %v903 = vrot.slane %v902, 1
    %v904 = vadd.f32 %v902, %v903
    %v905 = vrot.slane %v885, 4
    %v906 = vadd.f32 %v885, %v905
    %v907 = vrot.slane %v906, 2
    %v908 = vadd.f32 %v906, %v907
    %v909 = vrot.slane %v908, 1
    %v910 = vadd.f32 %v908, %v909
    %v911 = vrot.slane %v886, 4
    %v912 = vadd.f32 %v886, %v911
    %v913 = vrot.slane %v912, 2
    %v914 = vadd.f32 %v912, %v913
    %v915 = vrot.slane %v914, 1
    %v916 = vadd.f32 %v914, %v915
    %v917 = vrot.slane %v887, 4
    %v918 = vadd.f32 %v887, %v917
    %v919 = vrot.slane %v918, 2
    %v920 = vadd.f32 %v918, %v919
    %v921 = vrot.slane %v920, 1
    %v922 = vadd.f32 %v920, %v921
    %v923 = vrot.slane %v888, 4
    %v924 = vadd.f32 %v888, %v923
    %v925 = vrot.slane %v924, 2
    %v926 = vadd.f32 %v924, %v925
    %v927 = vrot.slane %v926, 1
    %v928 = vadd.f32 %v926, %v927
    %v929 = vrot.slane %v889, 4
    %v930 = vadd.f32 %v889, %v929
    %v931 = vrot.slane %v930, 2
    %v932 = vadd.f32 %v930, %v931
    %v933 = vrot.slane %v932, 1
    %v934 = vadd.f32 %v932, %v933
    %v935 = vrot.slane %v890, 4
    %v936 = vadd.f32 %v890, %v935
    %v937 = vrot.slane %v936, 2
    %v938 = vadd.f32 %v936, %v937
    %v939 = vrot.slane %v938, 1
    %v940 = vadd.f32 %v938, %v939
    %v941 = vrot.slane %v891, 4
    %v942 = vadd.f32 %v891, %v941
    %v943 = vrot.slane %v942, 2
    %v944 = vadd.f32 %v942, %v943
    %v945 = vrot.slane %v944, 1
    %v946 = vadd.f32 %v944, %v945
    %v947 = vrot.slane %v892, 4
    %v948 = vadd.f32 %v892, %v947
    %v949 = vrot.slane %v948, 2
    %v950 = vadd.f32 %v948, %v949
    %v951 = vrot.slane %v950, 1
    %v952 = vadd.f32 %v950, %v951
    %v954 = vlaneseq
    %v955 = vshrl.u32 %v954, 7
    %v956 = vsub.s32 0, %v955
    %v957 = vrot.slane %v70, %v956
    %958 = vset.pattern.permute.xlu0 0
    %959 = vperm.xlu0 %958, %v957
    %v960 = vpop.permute.xlu0 %959
    %v962 = vadd.f32 %v898, %v960
    %v963 = vadd.f32 %v904, %v960
    %v964 = vadd.f32 %v910, %v960
    %v965 = vadd.f32 %v916, %v960
    %v966 = vadd.f32 %v922, %v960
    %v967 = vadd.f32 %v928, %v960
    %v968 = vadd.f32 %v934, %v960
    %v969 = vadd.f32 %v940, %v960
    %v970 = vadd.f32 %v946, %v960
    %v971 = vadd.f32 %v952, %v960
    %v972 = vtanh.pop %v962
    %v973 = vtanh.pop %v963
    %v974 = vtanh.pop %v964
    %v975 = vtanh.pop %v965
    %v976 = vtanh.pop %v966
    %v977 = vtanh.pop %v967
    %v978 = vtanh.pop %v968
    %v979 = vtanh.pop %v969
    %v980 = vtanh.pop %v970
    %v981 = vtanh.pop %v971
    %v983 = vlaneseq
    %v984 = vshrl.u32 %v983, 7
    %v985 = vsub.s32 0, %v984
    %v986 = vrot.slane %v78, %v985
    %987 = vset.pattern.permute.xlu0 0
    %988 = vperm.xlu0 %987, %v986
    %v989 = vpop.permute.xlu0 %988
    %v991 = vmul.f32 %v989, %v972
    %v992 = vmul.f32 %v989, %v973
    %v993 = vmul.f32 %v989, %v974
    %v994 = vmul.f32 %v989, %v975
    %v995 = vmul.f32 %v989, %v976
    %v996 = vmul.f32 %v989, %v977
    %v997 = vmul.f32 %v989, %v978
    %v998 = vmul.f32 %v989, %v979
    %v999 = vmul.f32 %v989, %v980
    %v1000 = vmul.f32 %v989, %v981
    %v1001 = vadd.f32 %v868, %v991
    %v1002 = vadd.f32 %v869, %v992
    %v1003 = vadd.f32 %v870, %v993
    %v1004 = vadd.f32 %v871, %v994
    %v1005 = vadd.f32 %v872, %v995
    %v1006 = vadd.f32 %v873, %v996
    %v1007 = vadd.f32 %v874, %v997
    %v1008 = vadd.f32 %v875, %v998
    %v1009 = vadd.f32 %v876, %v999
    %v1010 = vadd.f32 %v877, %v1000
    %1012 = vset.pattern.permute.xlu0 0
    %1013 = vperm.xlu0 %1012, %v63
    %v1014 = vpop.permute.xlu0 %1013
    %v1016 = vmul.f32 %v46, %v1014
    %v1017 = vmul.f32 %v47, %v1014
    %v1018 = vmul.f32 %v48, %v1014
    %v1019 = vmul.f32 %v49, %v1014
    %v1020 = vmul.f32 %v50, %v1014
    %v1021 = vmul.f32 %v51, %v1014
    %v1022 = vmul.f32 %v52, %v1014
    %v1023 = vmul.f32 %v53, %v1014
    %v1024 = vmul.f32 %v54, %v1014
    %v1025 = vmul.f32 %v55, %v1014
    %v1026 = vrot.slane %v1016, 4
    %v1027 = vadd.f32 %v1016, %v1026
    %v1028 = vrot.slane %v1027, 2
    %v1029 = vadd.f32 %v1027, %v1028
    %v1030 = vrot.slane %v1029, 1
    %v1031 = vadd.f32 %v1029, %v1030
    %v1032 = vrot.slane %v1017, 4
    %v1033 = vadd.f32 %v1017, %v1032
    %v1034 = vrot.slane %v1033, 2
    %v1035 = vadd.f32 %v1033, %v1034
    %v1036 = vrot.slane %v1035, 1
    %v1037 = vadd.f32 %v1035, %v1036
    %v1038 = vrot.slane %v1018, 4
    %v1039 = vadd.f32 %v1018, %v1038
    %v1040 = vrot.slane %v1039, 2
    %v1041 = vadd.f32 %v1039, %v1040
    %v1042 = vrot.slane %v1041, 1
    %v1043 = vadd.f32 %v1041, %v1042
    %v1044 = vrot.slane %v1019, 4
    %v1045 = vadd.f32 %v1019, %v1044
    %v1046 = vrot.slane %v1045, 2
    %v1047 = vadd.f32 %v1045, %v1046
    %v1048 = vrot.slane %v1047, 1
    %v1049 = vadd.f32 %v1047, %v1048
    %v1050 = vrot.slane %v1020, 4
    %v1051 = vadd.f32 %v1020, %v1050
    %v1052 = vrot.slane %v1051, 2
    %v1053 = vadd.f32 %v1051, %v1052
    %v1054 = vrot.slane %v1053, 1
    %v1055 = vadd.f32 %v1053, %v1054
    %v1056 = vrot.slane %v1021, 4
    %v1057 = vadd.f32 %v1021, %v1056
    %v1058 = vrot.slane %v1057, 2
    %v1059 = vadd.f32 %v1057, %v1058
    %v1060 = vrot.slane %v1059, 1
    %v1061 = vadd.f32 %v1059, %v1060
    %v1062 = vrot.slane %v1022, 4
    %v1063 = vadd.f32 %v1022, %v1062
    %v1064 = vrot.slane %v1063, 2
    %v1065 = vadd.f32 %v1063, %v1064
    %v1066 = vrot.slane %v1065, 1
    %v1067 = vadd.f32 %v1065, %v1066
    %v1068 = vrot.slane %v1023, 4
    %v1069 = vadd.f32 %v1023, %v1068
    %v1070 = vrot.slane %v1069, 2
    %v1071 = vadd.f32 %v1069, %v1070
    %v1072 = vrot.slane %v1071, 1
    %v1073 = vadd.f32 %v1071, %v1072
    %v1074 = vrot.slane %v1024, 4
    %v1075 = vadd.f32 %v1024, %v1074
    %v1076 = vrot.slane %v1075, 2
    %v1077 = vadd.f32 %v1075, %v1076
    %v1078 = vrot.slane %v1077, 1
    %v1079 = vadd.f32 %v1077, %v1078
    %v1080 = vrot.slane %v1025, 4
    %v1081 = vadd.f32 %v1025, %v1080
    %v1082 = vrot.slane %v1081, 2
    %v1083 = vadd.f32 %v1081, %v1082
    %v1084 = vrot.slane %v1083, 1
    %v1085 = vadd.f32 %v1083, %v1084
    %v1087 = vlaneseq
    %v1088 = vshrl.u32 %v1087, 7
    %v1089 = vsub.s32 0, %v1088
    %v1090 = vrot.slane %v71, %v1089
    %1091 = vset.pattern.permute.xlu0 0
    %1092 = vperm.xlu0 %1091, %v1090
    %v1093 = vpop.permute.xlu0 %1092
    %v1095 = vadd.f32 %v1031, %v1093
    %v1096 = vadd.f32 %v1037, %v1093
    %v1097 = vadd.f32 %v1043, %v1093
    %v1098 = vadd.f32 %v1049, %v1093
    %v1099 = vadd.f32 %v1055, %v1093
    %v1100 = vadd.f32 %v1061, %v1093
    %v1101 = vadd.f32 %v1067, %v1093
    %v1102 = vadd.f32 %v1073, %v1093
    %v1103 = vadd.f32 %v1079, %v1093
    %v1104 = vadd.f32 %v1085, %v1093
    %v1105 = vtanh.pop %v1095
    %v1106 = vtanh.pop %v1096
    %v1107 = vtanh.pop %v1097
    %v1108 = vtanh.pop %v1098
    %v1109 = vtanh.pop %v1099
    %v1110 = vtanh.pop %v1100
    %v1111 = vtanh.pop %v1101
    %v1112 = vtanh.pop %v1102
    %v1113 = vtanh.pop %v1103
    %v1114 = vtanh.pop %v1104
    %v1116 = vlaneseq
    %v1117 = vshrl.u32 %v1116, 7
    %v1118 = vsub.s32 0, %v1117
    %v1119 = vrot.slane %v79, %v1118
    %1120 = vset.pattern.permute.xlu0 0
    %1121 = vperm.xlu0 %1120, %v1119
    %v1122 = vpop.permute.xlu0 %1121
    %v1124 = vmul.f32 %v1122, %v1105
    %v1125 = vmul.f32 %v1122, %v1106
    %v1126 = vmul.f32 %v1122, %v1107
    %v1127 = vmul.f32 %v1122, %v1108
    %v1128 = vmul.f32 %v1122, %v1109
    %v1129 = vmul.f32 %v1122, %v1110
    %v1130 = vmul.f32 %v1122, %v1111
    %v1131 = vmul.f32 %v1122, %v1112
    %v1132 = vmul.f32 %v1122, %v1113
    %v1133 = vmul.f32 %v1122, %v1114
    %v1134 = vadd.f32 %v1001, %v1124
    %v1135 = vadd.f32 %v1002, %v1125
    %v1136 = vadd.f32 %v1003, %v1126
    %v1137 = vadd.f32 %v1004, %v1127
    %v1138 = vadd.f32 %v1005, %v1128
    %v1139 = vadd.f32 %v1006, %v1129
    %v1140 = vadd.f32 %v1007, %v1130
    %v1141 = vadd.f32 %v1008, %v1131
    %v1142 = vadd.f32 %v1009, %v1132
    %v1143 = vadd.f32 %v1010, %v1133
    %v1144 = vlaneseq
    %v1145 = vshrl.u32 %v1144, 7
    %vm1146 = vcmp.gt.s32.totalorder %v1145, 0
    %vm1147 = vcmp.gt.s32.totalorder %v1145, 1
    %vm1148 = vcmp.gt.s32.totalorder %v1145, 2
    %vm1149 = vcmp.gt.s32.totalorder %v1145, 3
    %v1150 = vsel %vm1146, 1, 0
    %v1151 = vsel %vm1147, 1, 0
    %v1152 = vsel %vm1148, 1, 0
    %v1153 = vsel %vm1149, 1, 0
    %vm1154 = vcmp.eq.s32.totalorder %v1150, 1
    %vm1155 = vcmp.eq.s32.totalorder %v1151, 1
    %vm1156 = vcmp.eq.s32.totalorder %v1152, 1
    %vm1157 = vcmp.eq.s32.totalorder %v1153, 1
    %vm1168 = vcmask 1041409
    %v1169 = vsel %vm1168, %v1135, %v1134
    %vm1170 = vcmask 1042434
    %v1171 = vsel %vm1170, %v1136, %v1169
    %vm1172 = vcmask 1043459
    %v1173 = vsel %vm1172, %v1137, %v1171
    %v1174 = vsel %vm1168, %v1138, %v1135
    %v1175 = vsel %vm1170, %v1139, %v1174
    %v1176 = vsel %vm1172, %v1140, %v1175
    %v1177 = vsel %vm1168, %v1139, %v1136
    %v1178 = vsel %vm1170, %v1141, %v1177
    %v1179 = vsel %vm1172, %v1142, %v1178
    %v1180 = vsel %vm1168, %v1140, %v1137
    %v1181 = vsel %vm1170, %v1142, %v1180
    %v1182 = vsel %vm1172, %v1143, %v1181
    %v1187 = vsel %vm1154, %v1173, -1e+30
    %v1188 = vsel %vm1155, %v1176, -1e+30
    %v1189 = vsel %vm1156, %v1179, -1e+30
    %v1190 = vsel %vm1157, %v1182, -1e+30
    %vm1191 = vcmask 1043456
    %v1192 = vsel %vm1191, %v1187, -inf
    %v1193 = vrot.slane %v1192, 4
    %v1194 = vmax.f32 %v1192, %v1193
    %v1195 = vrot.slane %v1194, 2
    %v1196 = vmax.f32 %v1194, %v1195
    %v1197 = vrot.slane %v1196, 1
    %v1198 = vmax.f32 %v1196, %v1197
    %v1199 = vsel %vm1191, %v1188, -inf
    %v1200 = vrot.slane %v1199, 4
    %v1201 = vmax.f32 %v1199, %v1200
    %v1202 = vrot.slane %v1201, 2
    %v1203 = vmax.f32 %v1201, %v1202
    %v1204 = vrot.slane %v1203, 1
    %v1205 = vmax.f32 %v1203, %v1204
    %v1206 = vsel %vm1191, %v1189, -inf
    %v1207 = vrot.slane %v1206, 4
    %v1208 = vmax.f32 %v1206, %v1207
    %v1209 = vrot.slane %v1208, 2
    %v1210 = vmax.f32 %v1208, %v1209
    %v1211 = vrot.slane %v1210, 1
    %v1212 = vmax.f32 %v1210, %v1211
    %v1213 = vsel %vm1191, %v1190, -inf
    %v1214 = vrot.slane %v1213, 4
    %v1215 = vmax.f32 %v1213, %v1214
    %v1216 = vrot.slane %v1215, 2
    %v1217 = vmax.f32 %v1215, %v1216
    %v1218 = vrot.slane %v1217, 1
    %v1219 = vmax.f32 %v1217, %v1218
    %v1220 = vmax.f32 %v1198, %v1205
    %v1221 = vmax.f32 %v1212, %v1219
    %v1222 = vmax.f32 %v1220, %v1221
    %v1223 = vsub.f32 %v1134, %v1222
    %v1224 = vsub.f32 %v1135, %v1222
    %v1225 = vsub.f32 %v1136, %v1222
    %v1226 = vsub.f32 %v1137, %v1222
    %v1227 = vsub.f32 %v1138, %v1222
    %v1228 = vsub.f32 %v1139, %v1222
    %v1229 = vsub.f32 %v1140, %v1222
    %v1230 = vsub.f32 %v1141, %v1222
    %v1231 = vsub.f32 %v1142, %v1222
    %v1232 = vsub.f32 %v1143, %v1222
    %v1233 = vmul.f32 %v1223, 1.442695
    %v1234 = vpow.pop %v1233
    %v1235 = vmul.f32 %v1224, 1.442695
    %v1236 = vpow.pop %v1235
    %v1237 = vmul.f32 %v1225, 1.442695
    %v1238 = vpow.pop %v1237
    %v1239 = vmul.f32 %v1226, 1.442695
    %v1240 = vpow.pop %v1239
    %v1241 = vmul.f32 %v1227, 1.442695
    %v1242 = vpow.pop %v1241
    %v1243 = vmul.f32 %v1228, 1.442695
    %v1244 = vpow.pop %v1243
    %v1245 = vmul.f32 %v1229, 1.442695
    %v1246 = vpow.pop %v1245
    %v1247 = vmul.f32 %v1230, 1.442695
    %v1248 = vpow.pop %v1247
    %v1249 = vmul.f32 %v1231, 1.442695
    %v1250 = vpow.pop %v1249
    %v1251 = vmul.f32 %v1232, 1.442695
    %v1252 = vpow.pop %v1251
    %v1263 = vrot.slane %v1236, 7
    %v1264 = vsel %vm1168, %v1263, %v1234
    %v1265 = vrot.slane %v1238, 6
    %v1266 = vsel %vm1170, %v1265, %v1264
    %v1267 = vrot.slane %v1240, 5
    %v1268 = vsel %vm1172, %v1267, %v1266
    %v1269 = vrot.slane %v1242, 7
    %v1270 = vsel %vm1168, %v1269, %v1236
    %v1271 = vrot.slane %v1244, 6
    %v1272 = vsel %vm1170, %v1271, %v1270
    %v1273 = vrot.slane %v1246, 5
    %v1274 = vsel %vm1172, %v1273, %v1272
    %v1275 = vrot.slane %v1244, 7
    %v1276 = vsel %vm1168, %v1275, %v1238
    %v1277 = vrot.slane %v1248, 6
    %v1278 = vsel %vm1170, %v1277, %v1276
    %v1279 = vrot.slane %v1250, 5
    %v1280 = vsel %vm1172, %v1279, %v1278
    %v1281 = vrot.slane %v1246, 7
    %v1282 = vsel %vm1168, %v1281, %v1240
    %v1283 = vrot.slane %v1250, 6
    %v1284 = vsel %vm1170, %v1283, %v1282
    %v1285 = vrot.slane %v1252, 5
    %v1286 = vsel %vm1172, %v1285, %v1284
    %v1291 = vsel %vm1154, %v1268, 0.0
    %v1292 = vsel %vm1155, %v1274, 0.0
    %v1293 = vsel %vm1156, %v1280, 0.0
    %v1294 = vsel %vm1157, %v1286, 0.0
    %v1295 = vsel %vm1191, %v1291, 0.0
    %v1296 = vrot.slane %v1295, 4
    %v1297 = vadd.f32 %v1295, %v1296
    %v1298 = vrot.slane %v1297, 2
    %v1299 = vadd.f32 %v1297, %v1298
    %v1300 = vrot.slane %v1299, 1
    %v1301 = vadd.f32 %v1299, %v1300
    %v1302 = vsel %vm1191, %v1292, 0.0
    %v1303 = vrot.slane %v1302, 4
    %v1304 = vadd.f32 %v1302, %v1303
    %v1305 = vrot.slane %v1304, 2
    %v1306 = vadd.f32 %v1304, %v1305
    %v1307 = vrot.slane %v1306, 1
    %v1308 = vadd.f32 %v1306, %v1307
    %v1309 = vsel %vm1191, %v1293, 0.0
    %v1310 = vrot.slane %v1309, 4
    %v1311 = vadd.f32 %v1309, %v1310
    %v1312 = vrot.slane %v1311, 2
    %v1313 = vadd.f32 %v1311, %v1312
    %v1314 = vrot.slane %v1313, 1
    %v1315 = vadd.f32 %v1313, %v1314
    %v1316 = vsel %vm1191, %v1294, 0.0
    %v1317 = vrot.slane %v1316, 4
    %v1318 = vadd.f32 %v1316, %v1317
    %v1319 = vrot.slane %v1318, 2
    %v1320 = vadd.f32 %v1318, %v1319
    %v1321 = vrot.slane %v1320, 1
    %v1322 = vadd.f32 %v1320, %v1321
    %v1323 = vadd.f32 %v1301, %v1308
    %v1324 = vadd.f32 %v1323, %v1315
    %v1325 = vadd.f32 %v1324, %v1322
    %v1326 = vrcp.pop %v1325
    %v1327 = vmul.f32 %v1291, %v1326
    %v1328 = vmul.f32 %v1292, %v1326
    %v1329 = vmul.f32 %v1293, %v1326
    %v1330 = vmul.f32 %v1294, %v1326
    %v1336 = vunpack.c.l.s4 1966171168
    %v1337 = vunpack.c.0.s8 %v1336
    %v1338 = vlaneseq
    %v1339 = vshrl.u32 %v1338, 7
    %v1340 = vsub.s32 %v1337, %v1339
    %v1341 = vrot.slane %v1327, %v1340
    %v1342 = vcombine.high %v1341, %v1341
    %v1344 = vunpack.c.l.s4 1966171168
    %v1345 = vunpack.c.0.s8 %v1344
    %v1346 = vlaneseq
    %v1347 = vshrl.u32 %v1346, 7
    %v1348 = vsub.s32 %v1345, %v1347
    %v1349 = vrot.slane %v1341, %v1348
    %v1351 = vunpack.c.l.s4 1966171168
    %v1352 = vunpack.c.0.s8 %v1351
    %v1353 = vlaneseq
    %v1354 = vshrl.u32 %v1353, 7
    %v1355 = vsub.s32 %v1352, %v1354
    %v1356 = vrot.slane %v1342, %v1355
    %v1357 = vcombine.high %v1349, %v1349
    %v1358 = vcombine.high %v1356, %v1356
    %v1360 = vunpack.c.l.s4 1966171168
    %v1361 = vunpack.c.0.s8 %v1360
    %v1362 = vlaneseq
    %v1363 = vshrl.u32 %v1362, 7
    %v1364 = vsub.s32 %v1361, %v1363
    %v1365 = vrot.slane %v1328, %v1364
    %v1366 = vcombine.high %v1365, %v1365
    %v1368 = vunpack.c.l.s4 1966171168
    %v1369 = vunpack.c.0.s8 %v1368
    %v1370 = vlaneseq
    %v1371 = vshrl.u32 %v1370, 7
    %v1372 = vsub.s32 %v1369, %v1371
    %v1373 = vrot.slane %v1365, %v1372
    %v1375 = vunpack.c.l.s4 1966171168
    %v1376 = vunpack.c.0.s8 %v1375
    %v1377 = vlaneseq
    %v1378 = vshrl.u32 %v1377, 7
    %v1379 = vsub.s32 %v1376, %v1378
    %v1380 = vrot.slane %v1366, %v1379
    %v1381 = vcombine.high %v1373, %v1373
    %v1382 = vcombine.high %v1380, %v1380
    %v1384 = vunpack.c.l.s4 1966171168
    %v1385 = vunpack.c.0.s8 %v1384
    %v1386 = vlaneseq
    %v1387 = vshrl.u32 %v1386, 7
    %v1388 = vsub.s32 %v1385, %v1387
    %v1389 = vrot.slane %v1329, %v1388
    %v1390 = vcombine.high %v1389, %v1389
    %v1392 = vunpack.c.l.s4 1966171168
    %v1393 = vunpack.c.0.s8 %v1392
    %v1394 = vlaneseq
    %v1395 = vshrl.u32 %v1394, 7
    %v1396 = vsub.s32 %v1393, %v1395
    %v1397 = vrot.slane %v1389, %v1396
    %v1399 = vunpack.c.l.s4 1966171168
    %v1400 = vunpack.c.0.s8 %v1399
    %v1401 = vlaneseq
    %v1402 = vshrl.u32 %v1401, 7
    %v1403 = vsub.s32 %v1400, %v1402
    %v1404 = vrot.slane %v1390, %v1403
    %v1405 = vcombine.high %v1397, %v1397
    %v1406 = vcombine.high %v1404, %v1404
    %v1408 = vunpack.c.l.s4 1966171168
    %v1409 = vunpack.c.0.s8 %v1408
    %v1410 = vlaneseq
    %v1411 = vshrl.u32 %v1410, 7
    %v1412 = vsub.s32 %v1409, %v1411
    %v1413 = vrot.slane %v1330, %v1412
    %v1414 = vcombine.high %v1413, %v1413
    %v1416 = vunpack.c.l.s4 1966171168
    %v1417 = vunpack.c.0.s8 %v1416
    %v1418 = vlaneseq
    %v1419 = vshrl.u32 %v1418, 7
    %v1420 = vsub.s32 %v1417, %v1419
    %v1421 = vrot.slane %v1413, %v1420
    %v1423 = vunpack.c.l.s4 1966171168
    %v1424 = vunpack.c.0.s8 %v1423
    %v1425 = vlaneseq
    %v1426 = vshrl.u32 %v1425, 7
    %v1427 = vsub.s32 %v1424, %v1426
    %v1428 = vrot.slane %v1414, %v1427
    %v1429 = vcombine.high %v1421, %v1421
    %v1430 = vcombine.high %v1428, %v1428
    %v1431 = vlaneseq
    %v1432 = vshrl.u32 %v1431, 7
    %v1433 = vsub.s32 0, %v1432
    %v1434 = vrot.slane %v1349, %v1433
    %v1435 = vlaneseq
    %v1436 = vshrl.u32 %v1435, 7
    %v1437 = vsub.s32 0, %v1436
    %v1438 = vrot.slane %v1356, %v1437
    %v1439 = vlaneseq
    %v1440 = vshrl.u32 %v1439, 7
    %v1441 = vsub.s32 0, %v1440
    %v1442 = vrot.slane %v1357, %v1441
    %v1443 = vlaneseq
    %v1444 = vshrl.u32 %v1443, 7
    %v1445 = vsub.s32 0, %v1444
    %v1446 = vrot.slane %v1358, %v1445
    %v1447 = vlaneseq
    %v1448 = vshrl.u32 %v1447, 7
    %v1449 = vsub.s32 0, %v1448
    %v1450 = vrot.slane %v1373, %v1449
    %v1451 = vlaneseq
    %v1452 = vshrl.u32 %v1451, 7
    %v1453 = vsub.s32 0, %v1452
    %v1454 = vrot.slane %v1380, %v1453
    %v1455 = vlaneseq
    %v1456 = vshrl.u32 %v1455, 7
    %v1457 = vsub.s32 0, %v1456
    %v1458 = vrot.slane %v1381, %v1457
    %v1459 = vlaneseq
    %v1460 = vshrl.u32 %v1459, 7
    %v1461 = vsub.s32 0, %v1460
    %v1462 = vrot.slane %v1382, %v1461
    %v1463 = vlaneseq
    %v1464 = vshrl.u32 %v1463, 7
    %v1465 = vsub.s32 0, %v1464
    %v1466 = vrot.slane %v1397, %v1465
    %v1467 = vlaneseq
    %v1468 = vshrl.u32 %v1467, 7
    %v1469 = vsub.s32 0, %v1468
    %v1470 = vrot.slane %v1404, %v1469
    %v1471 = vlaneseq
    %v1472 = vshrl.u32 %v1471, 7
    %v1473 = vsub.s32 0, %v1472
    %v1474 = vrot.slane %v1405, %v1473
    %v1475 = vlaneseq
    %v1476 = vshrl.u32 %v1475, 7
    %v1477 = vsub.s32 0, %v1476
    %v1478 = vrot.slane %v1406, %v1477
    %v1479 = vlaneseq
    %v1480 = vshrl.u32 %v1479, 7
    %v1481 = vsub.s32 0, %v1480
    %v1482 = vrot.slane %v1421, %v1481
    %v1483 = vlaneseq
    %v1484 = vshrl.u32 %v1483, 7
    %v1485 = vsub.s32 0, %v1484
    %v1486 = vrot.slane %v1428, %v1485
    %v1487 = vlaneseq
    %v1488 = vshrl.u32 %v1487, 7
    %v1489 = vsub.s32 0, %v1488
    %v1490 = vrot.slane %v1429, %v1489
    %v1491 = vlaneseq
    %v1492 = vshrl.u32 %v1491, 7
    %v1493 = vsub.s32 0, %v1492
    %v1494 = vrot.slane %v1430, %v1493
    %v1511 = vmul.f32 %v46, %v1434
    %v1512 = vmul.f32 %v47, %v1438
    %v1513 = vmul.f32 %v48, %v1442
    %v1514 = vmul.f32 %v49, %v1446
    %v1515 = vmul.f32 %v47, %v1450
    %v1516 = vmul.f32 %v50, %v1454
    %v1517 = vmul.f32 %v51, %v1458
    %v1518 = vmul.f32 %v52, %v1462
    %v1519 = vmul.f32 %v48, %v1466
    %v1520 = vmul.f32 %v51, %v1470
    %v1521 = vmul.f32 %v53, %v1474
    %v1522 = vmul.f32 %v54, %v1478
    %v1523 = vmul.f32 %v49, %v1482
    %v1524 = vmul.f32 %v52, %v1486
    %v1525 = vmul.f32 %v54, %v1490
    %v1526 = vmul.f32 %v55, %v1494
    %v1527 = vadd.f32 %v1511, %v1512
    %v1528 = vadd.f32 %v1527, %v1513
    %v1529 = vadd.f32 %v1528, %v1514
    %v1530 = vadd.f32 %v1515, %v1516
    %v1531 = vadd.f32 %v1530, %v1517
    %v1532 = vadd.f32 %v1531, %v1518
    %v1533 = vadd.f32 %v1519, %v1520
    %v1534 = vadd.f32 %v1533, %v1521
    %v1535 = vadd.f32 %v1534, %v1522
    %v1536 = vadd.f32 %v1523, %v1524
    %v1537 = vadd.f32 %v1536, %v1525
    %v1538 = vadd.f32 %v1537, %v1526
    %v1539 = vadd.f32 %v1529, %v1532
    %v1540 = vadd.f32 %v1539, %v1535
    %v1541 = vadd.f32 %v1540, %v1538
    %v1542 = vld [vmem:[%s5] sm:$0xff]
    %v1543 = vld [vmem:[%s5 + $0x8] sm:$0xff]
    %v1544 = vld [vmem:[%s6] sm:$0xff]
    %v1545 = vld [vmem:[%s6 + $0x8] sm:$0xff]
    %1547 = vset.pattern.permute.xlu0 0
    %1548 = vperm.xlu0 %1547, %v1544
    %v1549 = vpop.permute.xlu0 %1548
    %1552 = vset.pattern.permute.xlu0 0
    %1553 = vperm.xlu0 %1552, %v1545
    %v1554 = vpop.permute.xlu0 %1553
    %vm1556 = vcmask 64512
    %v1558 = vsel %vm1556, %v1542, 0
    %v1561 = vsel %vm1556, %v1543, 0
    %1563 = vmatprep.subr.mxu0 0.0
    %1564 = vmatpush1.msra.mxu0 0.0
    %1565 = vmatprep.subr.mxu0 0.0
    %1566 = vmatpush1.msra.mxu0 0.0
    %1567 = vmatprep.subr.mxu0 0.0
    %1568 = vmatpush1.msra.mxu0 0.0
    %1569 = vmatprep.subr.mxu0 0.0
    %1570 = vmatpush1.msra.mxu0 0.0
    %1571 = vmatprep.subr.mxu0 0.0
    %1572 = vmatpush1.msra.mxu0 0.0
    %1573 = vmatprep.subr.mxu0 0.0
    %1574 = vmatpush1.msra.mxu0 0.0
    %1575 = vmatprep.subr.mxu0 0.0
    %1576 = vmatpush1.msra.mxu0 0.0
    %1577 = vmatprep.subr.mxu0 0.0
    %1578 = vmatpush1.msra.mxu0 0.0
    %1579 = vmatprep.subr.mxu0 0.0
    %1580 = vmatpush1.msra.mxu0 0.0
    %1581 = vmatprep.subr.mxu0 0.0
    %1582 = vmatpush1.msra.mxu0 0.0
    %1583 = vmatprep.subr.mxu0 0.0
    %1584 = vmatpush1.msra.mxu0 0.0
    %1585 = vmatprep.subr.mxu0 0.0
    %1586 = vmatpush1.msra.mxu0 0.0
    %1587 = vmatprep.subr.mxu0 0.0
    %1588 = vmatpush1.msra.mxu0 0.0
    %1589 = vmatprep.subr.mxu0 0.0
    %1590 = vmatpush1.msra.mxu0 0.0
    %1591 = vmatprep.subr.mxu0 0.0
    %1592 = vmatpush1.msra.mxu0 0.0
    %1593 = vmatprep.subr.mxu0 0.0
    %1594 = vmatpush1.msra.mxu0 %v1541
    %1595 = vmatprep.subr.mxu0 0.0
    %1596 = vmatpush2.msra.mxu0 0.0
    %1597 = vmatprep.subr.mxu0 0.0
    %1598 = vmatpush2.msra.mxu0 0.0
    %1599 = vmatprep.subr.mxu0 0.0
    %1600 = vmatpush2.msra.mxu0 0.0
    %1601 = vmatprep.subr.mxu0 0.0
    %1602 = vmatpush2.msra.mxu0 0.0
    %1603 = vmatprep.subr.mxu0 0.0
    %1604 = vmatpush2.msra.mxu0 0.0
    %1605 = vmatprep.subr.mxu0 0.0
    %1606 = vmatpush2.msra.mxu0 0.0
    %1607 = vmatprep.subr.mxu0 0.0
    %1608 = vmatpush2.msra.mxu0 0.0
    %1609 = vmatprep.subr.mxu0 0.0
    %1610 = vmatpush2.msra.mxu0 0.0
    %1611 = vmatprep.subr.mxu0 0.0
    %1612 = vmatpush2.msra.mxu0 0.0
    %1613 = vmatprep.subr.mxu0 0.0
    %1614 = vmatpush2.msra.mxu0 0.0
    %1615 = vmatprep.subr.mxu0 0.0
    %1616 = vmatpush2.msra.mxu0 0.0
    %1617 = vmatprep.subr.mxu0 0.0
    %1618 = vmatpush2.msra.mxu0 0.0
    %1619 = vmatprep.subr.mxu0 0.0
    %1620 = vmatpush2.msra.mxu0 0.0
    %1621 = vmatprep.subr.mxu0 0.0
    %1622 = vmatpush2.msra.mxu0 0.0
    %1623 = vmatprep.subr.mxu0 0.0
    %1624 = vmatpush2.msra.mxu0 0.0
    %1625 = vmatprep.subr.mxu0 0.0
    %1626 = vmatpush2.msra.mxu0 0.0
    %1627 = vmatprep.mubr.f32.mxu0 0.0
    %1628 = vmatmul.mubr.f32.gmra.mxu0 %v1558
    %v1629 = vpop.f32.mrf.mxu0
    %v1630 = vadd.f32 %v1549, %v1629
    %v1631 = vpop.f32.mrf.mxu0
    %1632 = vmatprep.mubr.f32.mxu0 0.0
    %1633 = vmatmul.mubr.f32.gmra.mxu0 %v1561
    %v1634 = vpop.f32.mrf.mxu0
    %v1635 = vadd.f32 %v1554, %v1634
    %v1636 = vpop.f32.mrf.mxu0
    %1637 = vdwg.mxu0
    %v1638 = vmax.f32 %v1630, 0.0
    %v1639 = vmax.f32 %v1635, 0.0
    %v1640 = vld [vmem:[%s7] sm:$0xff]
    %v1641 = vld [vmem:[%s7 + $0x8] sm:$0xff]
    %1643 = vset.pattern.permute.xlu0 0
    %1644 = vperm.xlu0 %1643, %v1640
    %v1645 = vpop.permute.xlu0 %1644
    %1648 = vset.pattern.permute.xlu0 0
    %1649 = vperm.xlu0 %1648, %v1641
    %v1650 = vpop.permute.xlu0 %1649
    %v1652 = vmul.f32 %v1638, %v1645
    %v1653 = vmul.f32 %v1639, %v1650
    %v1654 = vadd.f32 %v1652, %v1653
    %v1655 = vrot.slane %v1654, 4
    %v1656 = vadd.f32 %v1654, %v1655
    %v1657 = vrot.slane %v1656, 2
    %v1658 = vadd.f32 %v1656, %v1657
    %v1659 = vrot.slane %v1658, 1
    %v1660 = vadd.f32 %v1658, %v1659
    %v1661 = vld [vmem:[%s1] sm:$0x7f]
    %v1662 = vld [vmem:[%s8] sm:$0x7f]
    %1664 = vset.pattern.permute.xlu0 0
    %1665 = vperm.xlu0 %1664, %v1662
    %v1666 = vpop.permute.xlu0 %1665
    %v1668 = vmul.f32 %v1661, %v1666
    %vm1669 = vcmask 1046528
    %v1670 = vsel %vm1669, %v1668, 0.0
    %v1671 = vrot.slane %v1670, 4
    %v1672 = vadd.f32 %v1670, %v1671
    %v1673 = vrot.slane %v1672, 2
    %v1674 = vadd.f32 %v1672, %v1673
    %v1675 = vrot.slane %v1674, 1
    %v1676 = vadd.f32 %v1674, %v1675
    %v1677 = vld [vmem:[#allocation2] sm:$0x1]
    %1679 = vset.pattern.permute.xlu0 0
    %1680 = vperm.xlu0 %1679, %v1677
    %v1681 = vpop.permute.xlu0 %1680
    %v1683 = vlaneseq
    %v1684 = vshrl.u32 %v1683, 7
    %v1685 = vsub.s32 0, %v1684
    %v1686 = vrot.slane %v1681, %v1685
    %v1687 = vadd.f32 %v1676, %v1686
    %v1688 = vadd.f32 %v1687, %v1660
    %v1689 = vxor.u32 %v1688, 2147483648
    %v1690 = vmul.f32 %v1689, 1.442695
    %v1691 = vpow.pop %v1690
    %v1692 = vadd.f32 %v1691, 1.0
    %v1693 = vrcp.pop %v1692
    %v1694 = vmul.f32 1.0, %v1693
    %1695 = vst [vmem:[#allocation3] sm:$0x1] %v1694
    // Predicated region
    $region42: #{tpu_custom_call.1} parent=1 // pred_check
      _
    $region43: #{tpu_custom_call.1} parent=1 // pred_check_branch
      %1697 = sbr.rel (0) target = $region45
    $region44: #{tpu_custom_call.1} parent=1 // pred_region
      %s1699 = ssub.s32 16, 16
      %1700 = vsyncadd [#allocation4], %s1699
      %s1702 = sshll.u32 [#allocation3], 4
      %s1703 = int_to_ptr.vmem [resolvable:$true] %s1702
      %1705 = dma.vmem_to_hbm [thread:$0]  %s1703, 16, %s10, [#allocation4]
    $region45: #{tpu_custom_call.1} parent=1 // pred_fallthru
      _
    // Predicated region
    $region46: #{tpu_custom_call.1} parent=1 // pred_check
      _
    $region47: #{tpu_custom_call.1} parent=1 // pred_check_branch
      %1707 = sbr.rel (0) target = $region49
    $region48: #{tpu_custom_call.1} parent=1 // pred_region
      %1708 = dma.done [#allocation4], 16
    $region49: #{tpu_custom_call.1} parent=1 // pred_fallthru
      _
    %1709 = vsyncpa [#allocation4], 1

</llo_original>
